<compile_context>
chip_gen: v5e
topology: v5e:2x2
jax: 0.10.0
libtpu: 0.0.40
codegen_flags: <defaults>
</compile_context>

<pallas_src>
import functools

import jax
import jax.numpy as jnp
from jax.experimental import pallas as pl
from jax.experimental.pallas import tpu as pltpu

HIDDEN = 128   # LSTM hidden size (fixed by the module)
FC_MID = 256   # hidden width of the FC head


def _ceil_to(x, m):
    return ((x + m - 1) // m) * m


def encoder_kernel(xw_ref, whh_ref, w1_ref, b1_ref, w2_ref, b2_ref,
                   out_ref, h_sc, c_sc, *, seq_len, time_chunk):
    """One (batch_block, time_chunk) grid step of the LSTM recurrence.

    xw_ref : (Tc, Bblk, 4H) f32   precomputed x_t @ W_ih + bias, time-major
    whh_ref: (H, 4H)        bf16  recurrent weight
    w1/b1, w2/b2 : FC head (weights bf16, biases f32)
    out_ref: (Bblk, Lp)     f32   written only on the last time chunk
    h_sc/c_sc : (Bblk, H)   f32   LSTM state, persists across time chunks
    """
    H = HIDDEN
    c_idx = pl.program_id(1)            # time-chunk index (innermost grid axis)
    n_chunks = pl.num_programs(1)

    # Reset the state at the start of every batch block's time loop.
    @pl.when(c_idx == 0)
    def _():
        h_sc[...] = jnp.zeros_like(h_sc)
        c_sc[...] = jnp.zeros_like(c_sc)

    whh = whh_ref[...]                  # (H, 4H) bf16, loaded once per chunk
    chunk_start = c_idx * time_chunk
    needs_mask = (seq_len % time_chunk) != 0   # Python-level (static) decision

    def step(t, carry):
        h, c = carry                    # (Bblk, H) f32 each, live in vregs
        # Only the hidden-state matmul sits on the serial critical path.
        gates = xw_ref[t] + jnp.dot(h.astype(whh.dtype), whh,
                                    preferred_element_type=jnp.float32)
        i_g = jax.nn.sigmoid(gates[:, 0 * H:1 * H])
        f_g = jax.nn.sigmoid(gates[:, 1 * H:2 * H])
        g_g = jnp.tanh(gates[:, 2 * H:3 * H])
        o_g = jax.nn.sigmoid(gates[:, 3 * H:4 * H])
        c_new = f_g * c + i_g * g_g
        h_new = o_g * jnp.tanh(c_new)
        if needs_mask:                  # only emitted if T % Tc != 0
            valid = (chunk_start + t) < seq_len
            c_new = jnp.where(valid, c_new, c)
            h_new = jnp.where(valid, h_new, h)
        return (h_new, c_new)

    h_fin, c_fin = jax.lax.fori_loop(
        0, time_chunk, step, (h_sc[...], c_sc[...]),
        unroll=min(time_chunk, 8))

    h_sc[...] = h_fin
    c_sc[...] = c_fin

    # FC head on hn, only after the last time chunk.
    @pl.when(c_idx == n_chunks - 1)
    def _():
        z = jnp.dot(h_fin.astype(w1_ref.dtype), w1_ref[...],
                    preferred_element_type=jnp.float32) + b1_ref[...]
        z = jnp.maximum(z, 0.0)                                   # ReLU
        y = jnp.dot(z.astype(w2_ref.dtype), w2_ref[...],
                    preferred_element_type=jnp.float32) + b2_ref[...]
        out_ref[...] = y.astype(out_ref.dtype)


def encoder_forward(x, params, *, mm_dtype=jnp.bfloat16, batch_block=64):
    """x: (B, T, D) float32, batch_first like nn.LSTM(batch_first=True)."""
    B, T, D = x.shape
    H = HIDDEN
    latent = params["w2"].shape[1]
    Lp = _ceil_to(latent, 128)                      # lane-dense output width

    Bblk = min(_ceil_to(B, 8), _ceil_to(batch_block, 8))  # rows per grid block
    Bp = _ceil_to(_ceil_to(B, 8), Bblk)                    # padded batch
    # Budget ~8 MiB for the double-buffered XW chunk (safe on v5e/v6e/v7x).
    xw_bytes_per_step = Bblk * 4 * H * 4
    Tc = max(1, min(T, (8 << 20) // (2 * xw_bytes_per_step)))
    Tp = _ceil_to(T, Tc)
    nb, nc = Bp // Bblk, Tp // Tc

    # Pad batch/time with zeros; padded rows/steps never affect the real rows
    # (rows are independent; padded time steps are masked inside the kernel).
    x_p = jnp.pad(x, ((0, Bp - B), (0, Tp - T), (0, 0)))

    # Hoisted input projection: one big matmul with M = B*T rows, produced
    # directly time-major (transpose folded into the matmul output).
    xw = jnp.einsum("btd,dg->tbg", x_p, params["wih"],
                    preferred_element_type=jnp.float32) + params["b"]

    whh = params["whh"].astype(mm_dtype)
    w1 = params["w1"].astype(mm_dtype)
    b1 = params["b1"]
    w2 = jnp.pad(params["w2"], ((0, 0), (0, Lp - latent))).astype(mm_dtype)
    b2 = jnp.pad(params["b2"], ((0, 0), (0, Lp - latent)))

    kernel = functools.partial(encoder_kernel, seq_len=T, time_chunk=Tc)

    out = pl.pallas_call(
        kernel,
        out_shape=jax.ShapeDtypeStruct((Bp, Lp), jnp.float32),
        grid_spec=pltpu.PrefetchScalarGridSpec(
            num_scalar_prefetch=0,
            grid=(nb, nc),                           # time (recurrence) last
            in_specs=[
                pl.BlockSpec((Tc, Bblk, 4 * H), lambda b, c: (c, b, 0)),  # XW
                pl.BlockSpec((H, 4 * H), lambda b, c: (0, 0)),            # W_hh
                pl.BlockSpec((H, FC_MID), lambda b, c: (0, 0)),           # fc1 W
                pl.BlockSpec((1, FC_MID), lambda b, c: (0, 0)),           # fc1 b
                pl.BlockSpec((FC_MID, Lp), lambda b, c: (0, 0)),          # fc2 W
                pl.BlockSpec((1, Lp), lambda b, c: (0, 0)),               # fc2 b
            ],
            out_specs=pl.BlockSpec((Bblk, Lp), lambda b, c: (b, 0)),
            scratch_shapes=[
                pltpu.VMEM((Bblk, H), jnp.float32),   # h state (f32)
                pltpu.VMEM((Bblk, H), jnp.float32),   # c state (f32)
            ],
        ),
        compiler_params=pltpu.CompilerParams(
            dimension_semantics=("parallel", "arbitrary")),
    )(xw, whh, w1, b1, w2, b2)

    return out[:B, :latent]


def init_params(key, input_dim, latent_dim=128):
    """Deterministic synthetic params (PyTorch-style uniform(-1/sqrt(H), 1/sqrt(H)))."""
    ks = jax.random.split(key, 8)
    s = 1.0 / jnp.sqrt(jnp.float32(HIDDEN))

    def u(k, shape):
        return jax.random.uniform(k, shape, jnp.float32, minval=-s, maxval=s)

    return {
        "wih": u(ks[0], (input_dim, 4 * HIDDEN)),   # transposed PyTorch weight_ih_l0
        "whh": u(ks[1], (HIDDEN, 4 * HIDDEN)),      # transposed PyTorch weight_hh_l0
        "b":   u(ks[2], (1, 4 * HIDDEN)) + u(ks[3], (1, 4 * HIDDEN)),  # b_ih + b_hh
        "w1":  u(ks[4], (HIDDEN, FC_MID)),
        "b1":  u(ks[5], (1, FC_MID)),
        "w2":  u(ks[6], (FC_MID, latent_dim)),
        "b2":  u(ks[7], (1, latent_dim)),
    }


def encoder_ref_mixed(x, params, *, mm_dtype=jnp.bfloat16):
    """Pure-JAX reference mirroring the kernel's precision policy
    (bf16 matmul operands on the recurrent/FC paths, f32 accumulation/state)."""
    B, T, D = x.shape
    H = HIDDEN
    xw = jnp.einsum("btd,dg->tbg", x, params["wih"],
                    preferred_element_type=jnp.float32) + params["b"]
    whh = params["whh"].astype(mm_dtype)

    def step(carry, xw_t):
        h, c = carry
        gates = xw_t + jnp.dot(h.astype(mm_dtype), whh,
                               preferred_element_type=jnp.float32)
        i = jax.nn.sigmoid(gates[:, 0 * H:1 * H])
        f = jax.nn.sigmoid(gates[:, 1 * H:2 * H])
        g = jnp.tanh(gates[:, 2 * H:3 * H])
        o = jax.nn.sigmoid(gates[:, 3 * H:4 * H])
        c = f * c + i * g
        h = o * jnp.tanh(c)
        return (h, c), None

    h0 = jnp.zeros((B, H), jnp.float32)
    c0 = jnp.zeros((B, H), jnp.float32)
    (hn, _), _ = jax.lax.scan(step, (h0, c0), xw)
    z = jnp.maximum(jnp.dot(hn.astype(mm_dtype), params["w1"].astype(mm_dtype),
                            preferred_element_type=jnp.float32) + params["b1"], 0.0)
    return jnp.dot(z.astype(mm_dtype), params["w2"].astype(mm_dtype),
                   preferred_element_type=jnp.float32) + params["b2"]


def encoder_ref_f32(x, params):
    """Pure-f32 reference matching the PyTorch module exactly."""
    B, T, D = x.shape
    H = HIDDEN

    def step(carry, xt):
        h, c = carry
        gates = xt @ params["wih"] + h @ params["whh"] + params["b"][0]
        i = jax.nn.sigmoid(gates[:, 0 * H:1 * H])
        f = jax.nn.sigmoid(gates[:, 1 * H:2 * H])
        g = jnp.tanh(gates[:, 2 * H:3 * H])
        o = jax.nn.sigmoid(gates[:, 3 * H:4 * H])
        c = f * c + i * g
        h = o * jnp.tanh(c)
        return (h, c), None

    h0 = jnp.zeros((B, H), jnp.float32)
    c0 = jnp.zeros((B, H), jnp.float32)
    (hn, _), _ = jax.lax.scan(step, (h0, c0), jnp.transpose(x, (1, 0, 2)))
    z = jnp.maximum(hn @ params["w1"] + params["b1"][0], 0.0)
    return z @ params["w2"] + params["b2"][0]


if __name__ == "__main__":
    B, T, D, LATENT = 2, 8, 16, 128
    key = jax.random.PRNGKey(0)
    k_x, k_p = jax.random.split(key)

    x = jax.random.normal(k_x, (B, T, D), jnp.float32)
    params = init_params(k_p, input_dim=D, latent_dim=LATENT)

    out = encoder_forward(x, params)
    out = jax.block_until_ready(out)
    assert out.shape == (B, LATENT)

    # Strict check against a reference with the same precision policy.
    ref_mixed = encoder_ref_mixed(x, params)
    assert jnp.allclose(out, ref_mixed, atol=2e-3, rtol=2e-3), \
        "mismatch vs mixed-precision reference"

    # Sanity check against the exact f32 PyTorch-equivalent forward
    # (loose tolerance accounts for bf16 MXU operands with f32 accumulation).
    ref_f32 = encoder_ref_f32(x, params)
    assert jnp.allclose(out, ref_f32, atol=5e-2, rtol=5e-2), \
        "mismatch vs f32 reference"

    print("KERNEL_OK")
</pallas_src>

<mosaic_0001>
module attributes {stable_mosaic.version = 11 : i64} {
  func.func @encoder_kernel(%arg0: i32, %arg1: i32, %arg2: memref<8x8x512xf32, #tpu.memory_space<vmem>>, %arg3: memref<128x512xbf16, #tpu.memory_space<vmem>>, %arg4: memref<128x256xbf16, #tpu.memory_space<vmem>>, %arg5: memref<1x256xf32, #tpu.memory_space<vmem>>, %arg6: memref<256x128xbf16, #tpu.memory_space<vmem>>, %arg7: memref<1x128xf32, #tpu.memory_space<vmem>>, %arg8: memref<8x128xf32, #tpu.memory_space<vmem>>, %arg9: memref<8x128xf32, #tpu.memory_space<vmem>>, %arg10: memref<8x128xf32, #tpu.memory_space<vmem>>) attributes {dimension_semantics = [#tpu.dimension_semantics<parallel>, #tpu.dimension_semantics<arbitrary>], iteration_bounds = array<i64: 1, 1>, scalar_prefetch = 0 : i64, scratch_operands = 2 : i64, tpu.core_type = #tpu.core_type<tc>, window_params = [{transform_indices = @transform_0, window_bounds = array<i64: 8, 8, 512>}, {pipeline_mode = #tpu.pipeline_mode<synchronous>, transform_indices = @transform_1, window_bounds = array<i64: 128, 512>}, {pipeline_mode = #tpu.pipeline_mode<synchronous>, transform_indices = @transform_2, window_bounds = array<i64: 128, 256>}, {pipeline_mode = #tpu.pipeline_mode<synchronous>, transform_indices = @transform_3, window_bounds = array<i64: 1, 256>}, {pipeline_mode = #tpu.pipeline_mode<synchronous>, transform_indices = @transform_4, window_bounds = array<i64: 256, 128>}, {pipeline_mode = #tpu.pipeline_mode<synchronous>, transform_indices = @transform_5, window_bounds = array<i64: 1, 128>}, {transform_indices = @transform_6, window_bounds = array<i64: 8, 128>}]} {
    %c0_i32 = arith.constant 0 : i32
    %0 = arith.cmpi eq, %arg1, %c0_i32 : i32
    %1 = arith.extui %0 : i1 to i32
    %c0_i32_0 = arith.constant 0 : i32
    %2 = arith.cmpi ne, %1, %c0_i32_0 : i32
    scf.if %2 {
      %cst_60 = arith.constant 0.000000e+00 : f32
      %259 = vector.broadcast %cst_60 : f32 to vector<8x128xf32>
      %c0_61 = arith.constant 0 : index
      %c0_62 = arith.constant 0 : index
      %260 = vector.load %arg9[%c0_61, %c0_62] : memref<8x128xf32, #tpu.memory_space<vmem>>, vector<8x128xf32>
      tpu.vector_store %arg9[%c0_61, %c0_62], %259 {strides = array<i32>} : memref<8x128xf32, #tpu.memory_space<vmem>>, vector<8x128xf32>,
      %cst_63 = arith.constant 0.000000e+00 : f32
      %261 = vector.broadcast %cst_63 : f32 to vector<8x128xf32>
      %c0_64 = arith.constant 0 : index
      %c0_65 = arith.constant 0 : index
      %262 = vector.load %arg10[%c0_64, %c0_65] : memref<8x128xf32, #tpu.memory_space<vmem>>, vector<8x128xf32>
      tpu.vector_store %arg10[%c0_64, %c0_65], %261 {strides = array<i32>} : memref<8x128xf32, #tpu.memory_space<vmem>>, vector<8x128xf32>,
    } else {
    }
    %c0 = arith.constant 0 : index
    %c0_1 = arith.constant 0 : index
    %3 = vector.load %arg3[%c0, %c0_1] : memref<128x512xbf16, #tpu.memory_space<vmem>>, vector<128x512xbf16>
    %c0_2 = arith.constant 0 : index
    %c0_3 = arith.constant 0 : index
    %4 = vector.load %arg9[%c0_2, %c0_3] : memref<8x128xf32, #tpu.memory_space<vmem>>, vector<8x128xf32>
    %c0_4 = arith.constant 0 : index
    %c0_5 = arith.constant 0 : index
    %5 = vector.load %arg10[%c0_4, %c0_5] : memref<8x128xf32, #tpu.memory_space<vmem>>, vector<8x128xf32>
    %c0_i32_6 = arith.constant 0 : i32
    %6 = arith.index_cast %c0_i32_6 : i32 to index
    %c0_7 = arith.constant 0 : index
    %c0_8 = arith.constant 0 : index
    %7 = vector.load %arg2[%6, %c0_7, %c0_8] : memref<8x8x512xf32, #tpu.memory_space<vmem>>, vector<1x8x512xf32>
    %8 = vector.shape_cast %7 : vector<1x8x512xf32> to vector<8x512xf32>
    %9 = arith.truncf %4 : vector<8x128xf32> to vector<8x128xbf16>
    %cst = arith.constant dense<0.000000e+00> : vector<8x512xf32>
    %10 = tpu.matmul %9, %3, %cst {dimension_numbers = #tpu.dot_dimension_numbers<[1], [0], [0], [1], [0, 0, 1, 1], [], []>} : vector<8x128xbf16>, vector<128x512xbf16>, vector<8x512xf32> -> vector<8x512xf32>
    %11 = arith.addf %8, %10 : vector<8x512xf32>
    %12 = vector.extract_strided_slice %11 {offsets = [0, 0], sizes = [8, 128], strides = [1, 1]} : vector<8x512xf32> to vector<8x128xf32>
    %13 = arith.negf %12 : vector<8x128xf32>
    %14 = math.exp %13 : vector<8x128xf32>
    %cst_9 = arith.constant 1.000000e+00 : f32
    %15 = vector.broadcast %cst_9 : f32 to vector<8x128xf32>
    %16 = arith.addf %15, %14 : vector<8x128xf32>
    %17 = arith.divf %15, %16 : vector<8x128xf32>
    %18 = vector.extract_strided_slice %11 {offsets = [0, 128], sizes = [8, 128], strides = [1, 1]} : vector<8x512xf32> to vector<8x128xf32>
    %19 = arith.negf %18 : vector<8x128xf32>
    %20 = math.exp %19 : vector<8x128xf32>
    %cst_10 = arith.constant 1.000000e+00 : f32
    %21 = vector.broadcast %cst_10 : f32 to vector<8x128xf32>
    %22 = arith.addf %21, %20 : vector<8x128xf32>
    %23 = arith.divf %21, %22 : vector<8x128xf32>
    %24 = vector.extract_strided_slice %11 {offsets = [0, 256], sizes = [8, 128], strides = [1, 1]} : vector<8x512xf32> to vector<8x128xf32>
    %25 = math.tanh %24 : vector<8x128xf32>
    %26 = vector.extract_strided_slice %11 {offsets = [0, 384], sizes = [8, 128], strides = [1, 1]} : vector<8x512xf32> to vector<8x128xf32>
    %27 = arith.negf %26 : vector<8x128xf32>
    %28 = math.exp %27 : vector<8x128xf32>
    %cst_11 = arith.constant 1.000000e+00 : f32
    %29 = vector.broadcast %cst_11 : f32 to vector<8x128xf32>
    %30 = arith.addf %29, %28 : vector<8x128xf32>
    %31 = arith.divf %29, %30 : vector<8x128xf32>
    %32 = arith.mulf %23, %5 : vector<8x128xf32>
    %33 = arith.mulf %17, %25 : vector<8x128xf32>
    %34 = arith.addf %32, %33 : vector<8x128xf32>
    %35 = math.tanh %34 : vector<8x128xf32>
    %36 = arith.mulf %31, %35 : vector<8x128xf32>
    %c1_i32 = arith.constant 1 : i32
    %37 = arith.index_cast %c1_i32 : i32 to index
    %c0_12 = arith.constant 0 : index
    %c0_13 = arith.constant 0 : index
    %38 = vector.load %arg2[%37, %c0_12, %c0_13] : memref<8x8x512xf32, #tpu.memory_space<vmem>>, vector<1x8x512xf32>
    %39 = vector.shape_cast %38 : vector<1x8x512xf32> to vector<8x512xf32>
    %40 = arith.truncf %36 : vector<8x128xf32> to vector<8x128xbf16>
    %cst_14 = arith.constant dense<0.000000e+00> : vector<8x512xf32>
    %41 = tpu.matmul %40, %3, %cst_14 {dimension_numbers = #tpu.dot_dimension_numbers<[1], [0], [0], [1], [0, 0, 1, 1], [], []>} : vector<8x128xbf16>, vector<128x512xbf16>, vector<8x512xf32> -> vector<8x512xf32>
    %42 = arith.addf %39, %41 : vector<8x512xf32>
    %43 = vector.extract_strided_slice %42 {offsets = [0, 0], sizes = [8, 128], strides = [1, 1]} : vector<8x512xf32> to vector<8x128xf32>
    %44 = arith.negf %43 : vector<8x128xf32>
    %45 = math.exp %44 : vector<8x128xf32>
    %cst_15 = arith.constant 1.000000e+00 : f32
    %46 = vector.broadcast %cst_15 : f32 to vector<8x128xf32>
    %47 = arith.addf %46, %45 : vector<8x128xf32>
    %48 = arith.divf %46, %47 : vector<8x128xf32>
    %49 = vector.extract_strided_slice %42 {offsets = [0, 128], sizes = [8, 128], strides = [1, 1]} : vector<8x512xf32> to vector<8x128xf32>
    %50 = arith.negf %49 : vector<8x128xf32>
    %51 = math.exp %50 : vector<8x128xf32>
    %cst_16 = arith.constant 1.000000e+00 : f32
    %52 = vector.broadcast %cst_16 : f32 to vector<8x128xf32>
    %53 = arith.addf %52, %51 : vector<8x128xf32>
    %54 = arith.divf %52, %53 : vector<8x128xf32>
    %55 = vector.extract_strided_slice %42 {offsets = [0, 256], sizes = [8, 128], strides = [1, 1]} : vector<8x512xf32> to vector<8x128xf32>
    %56 = math.tanh %55 : vector<8x128xf32>
    %57 = vector.extract_strided_slice %42 {offsets = [0, 384], sizes = [8, 128], strides = [1, 1]} : vector<8x512xf32> to vector<8x128xf32>
    %58 = arith.negf %57 : vector<8x128xf32>
    %59 = math.exp %58 : vector<8x128xf32>
    %cst_17 = arith.constant 1.000000e+00 : f32
    %60 = vector.broadcast %cst_17 : f32 to vector<8x128xf32>
    %61 = arith.addf %60, %59 : vector<8x128xf32>
    %62 = arith.divf %60, %61 : vector<8x128xf32>
    %63 = arith.mulf %54, %34 : vector<8x128xf32>
    %64 = arith.mulf %48, %56 : vector<8x128xf32>
    %65 = arith.addf %63, %64 : vector<8x128xf32>
    %66 = math.tanh %65 : vector<8x128xf32>
    %67 = arith.mulf %62, %66 : vector<8x128xf32>
    %c2_i32 = arith.constant 2 : i32
    %68 = arith.index_cast %c2_i32 : i32 to index
    %c0_18 = arith.constant 0 : index
    %c0_19 = arith.constant 0 : index
    %69 = vector.load %arg2[%68, %c0_18, %c0_19] : memref<8x8x512xf32, #tpu.memory_space<vmem>>, vector<1x8x512xf32>
    %70 = vector.shape_cast %69 : vector<1x8x512xf32> to vector<8x512xf32>
    %71 = arith.truncf %67 : vector<8x128xf32> to vector<8x128xbf16>
    %cst_20 = arith.constant dense<0.000000e+00> : vector<8x512xf32>
    %72 = tpu.matmul %71, %3, %cst_20 {dimension_numbers = #tpu.dot_dimension_numbers<[1], [0], [0], [1], [0, 0, 1, 1], [], []>} : vector<8x128xbf16>, vector<128x512xbf16>, vector<8x512xf32> -> vector<8x512xf32>
    %73 = arith.addf %70, %72 : vector<8x512xf32>
    %74 = vector.extract_strided_slice %73 {offsets = [0, 0], sizes = [8, 128], strides = [1, 1]} : vector<8x512xf32> to vector<8x128xf32>
    %75 = arith.negf %74 : vector<8x128xf32>
    %76 = math.exp %75 : vector<8x128xf32>
    %cst_21 = arith.constant 1.000000e+00 : f32
    %77 = vector.broadcast %cst_21 : f32 to vector<8x128xf32>
    %78 = arith.addf %77, %76 : vector<8x128xf32>
    %79 = arith.divf %77, %78 : vector<8x128xf32>
    %80 = vector.extract_strided_slice %73 {offsets = [0, 128], sizes = [8, 128], strides = [1, 1]} : vector<8x512xf32> to vector<8x128xf32>
    %81 = arith.negf %80 : vector<8x128xf32>
    %82 = math.exp %81 : vector<8x128xf32>
    %cst_22 = arith.constant 1.000000e+00 : f32
    %83 = vector.broadcast %cst_22 : f32 to vector<8x128xf32>
    %84 = arith.addf %83, %82 : vector<8x128xf32>
    %85 = arith.divf %83, %84 : vector<8x128xf32>
    %86 = vector.extract_strided_slice %73 {offsets = [0, 256], sizes = [8, 128], strides = [1, 1]} : vector<8x512xf32> to vector<8x128xf32>
    %87 = math.tanh %86 : vector<8x128xf32>
    %88 = vector.extract_strided_slice %73 {offsets = [0, 384], sizes = [8, 128], strides = [1, 1]} : vector<8x512xf32> to vector<8x128xf32>
    %89 = arith.negf %88 : vector<8x128xf32>
    %90 = math.exp %89 : vector<8x128xf32>
    %cst_23 = arith.constant 1.000000e+00 : f32
    %91 = vector.broadcast %cst_23 : f32 to vector<8x128xf32>
    %92 = arith.addf %91, %90 : vector<8x128xf32>
    %93 = arith.divf %91, %92 : vector<8x128xf32>
    %94 = arith.mulf %85, %65 : vector<8x128xf32>
    %95 = arith.mulf %79, %87 : vector<8x128xf32>
    %96 = arith.addf %94, %95 : vector<8x128xf32>
    %97 = math.tanh %96 : vector<8x128xf32>
    %98 = arith.mulf %93, %97 : vector<8x128xf32>
    %c3_i32 = arith.constant 3 : i32
    %99 = arith.index_cast %c3_i32 : i32 to index
    %c0_24 = arith.constant 0 : index
    %c0_25 = arith.constant 0 : index
    %100 = vector.load %arg2[%99, %c0_24, %c0_25] : memref<8x8x512xf32, #tpu.memory_space<vmem>>, vector<1x8x512xf32>
    %101 = vector.shape_cast %100 : vector<1x8x512xf32> to vector<8x512xf32>
    %102 = arith.truncf %98 : vector<8x128xf32> to vector<8x128xbf16>
    %cst_26 = arith.constant dense<0.000000e+00> : vector<8x512xf32>
    %103 = tpu.matmul %102, %3, %cst_26 {dimension_numbers = #tpu.dot_dimension_numbers<[1], [0], [0], [1], [0, 0, 1, 1], [], []>} : vector<8x128xbf16>, vector<128x512xbf16>, vector<8x512xf32> -> vector<8x512xf32>
    %104 = arith.addf %101, %103 : vector<8x512xf32>
    %105 = vector.extract_strided_slice %104 {offsets = [0, 0], sizes = [8, 128], strides = [1, 1]} : vector<8x512xf32> to vector<8x128xf32>
    %106 = arith.negf %105 : vector<8x128xf32>
    %107 = math.exp %106 : vector<8x128xf32>
    %cst_27 = arith.constant 1.000000e+00 : f32
    %108 = vector.broadcast %cst_27 : f32 to vector<8x128xf32>
    %109 = arith.addf %108, %107 : vector<8x128xf32>
    %110 = arith.divf %108, %109 : vector<8x128xf32>
    %111 = vector.extract_strided_slice %104 {offsets = [0, 128], sizes = [8, 128], strides = [1, 1]} : vector<8x512xf32> to vector<8x128xf32>
    %112 = arith.negf %111 : vector<8x128xf32>
    %113 = math.exp %112 : vector<8x128xf32>
    %cst_28 = arith.constant 1.000000e+00 : f32
    %114 = vector.broadcast %cst_28 : f32 to vector<8x128xf32>
    %115 = arith.addf %114, %113 : vector<8x128xf32>
    %116 = arith.divf %114, %115 : vector<8x128xf32>
    %117 = vector.extract_strided_slice %104 {offsets = [0, 256], sizes = [8, 128], strides = [1, 1]} : vector<8x512xf32> to vector<8x128xf32>
    %118 = math.tanh %117 : vector<8x128xf32>
    %119 = vector.extract_strided_slice %104 {offsets = [0, 384], sizes = [8, 128], strides = [1, 1]} : vector<8x512xf32> to vector<8x128xf32>
    %120 = arith.negf %119 : vector<8x128xf32>
    %121 = math.exp %120 : vector<8x128xf32>
    %cst_29 = arith.constant 1.000000e+00 : f32
    %122 = vector.broadcast %cst_29 : f32 to vector<8x128xf32>
    %123 = arith.addf %122, %121 : vector<8x128xf32>
    %124 = arith.divf %122, %123 : vector<8x128xf32>
    %125 = arith.mulf %116, %96 : vector<8x128xf32>
    %126 = arith.mulf %110, %118 : vector<8x128xf32>
    %127 = arith.addf %125, %126 : vector<8x128xf32>
    %128 = math.tanh %127 : vector<8x128xf32>
    %129 = arith.mulf %124, %128 : vector<8x128xf32>
    %c4_i32 = arith.constant 4 : i32
    %130 = arith.index_cast %c4_i32 : i32 to index
    %c0_30 = arith.constant 0 : index
    %c0_31 = arith.constant 0 : index
    %131 = vector.load %arg2[%130, %c0_30, %c0_31] : memref<8x8x512xf32, #tpu.memory_space<vmem>>, vector<1x8x512xf32>
    %132 = vector.shape_cast %131 : vector<1x8x512xf32> to vector<8x512xf32>
    %133 = arith.truncf %129 : vector<8x128xf32> to vector<8x128xbf16>
    %cst_32 = arith.constant dense<0.000000e+00> : vector<8x512xf32>
    %134 = tpu.matmul %133, %3, %cst_32 {dimension_numbers = #tpu.dot_dimension_numbers<[1], [0], [0], [1], [0, 0, 1, 1], [], []>} : vector<8x128xbf16>, vector<128x512xbf16>, vector<8x512xf32> -> vector<8x512xf32>
    %135 = arith.addf %132, %134 : vector<8x512xf32>
    %136 = vector.extract_strided_slice %135 {offsets = [0, 0], sizes = [8, 128], strides = [1, 1]} : vector<8x512xf32> to vector<8x128xf32>
    %137 = arith.negf %136 : vector<8x128xf32>
    %138 = math.exp %137 : vector<8x128xf32>
    %cst_33 = arith.constant 1.000000e+00 : f32
    %139 = vector.broadcast %cst_33 : f32 to vector<8x128xf32>
    %140 = arith.addf %139, %138 : vector<8x128xf32>
    %141 = arith.divf %139, %140 : vector<8x128xf32>
    %142 = vector.extract_strided_slice %135 {offsets = [0, 128], sizes = [8, 128], strides = [1, 1]} : vector<8x512xf32> to vector<8x128xf32>
    %143 = arith.negf %142 : vector<8x128xf32>
    %144 = math.exp %143 : vector<8x128xf32>
    %cst_34 = arith.constant 1.000000e+00 : f32
    %145 = vector.broadcast %cst_34 : f32 to vector<8x128xf32>
    %146 = arith.addf %145, %144 : vector<8x128xf32>
    %147 = arith.divf %145, %146 : vector<8x128xf32>
    %148 = vector.extract_strided_slice %135 {offsets = [0, 256], sizes = [8, 128], strides = [1, 1]} : vector<8x512xf32> to vector<8x128xf32>
    %149 = math.tanh %148 : vector<8x128xf32>
    %150 = vector.extract_strided_slice %135 {offsets = [0, 384], sizes = [8, 128], strides = [1, 1]} : vector<8x512xf32> to vector<8x128xf32>
    %151 = arith.negf %150 : vector<8x128xf32>
    %152 = math.exp %151 : vector<8x128xf32>
    %cst_35 = arith.constant 1.000000e+00 : f32
    %153 = vector.broadcast %cst_35 : f32 to vector<8x128xf32>
    %154 = arith.addf %153, %152 : vector<8x128xf32>
    %155 = arith.divf %153, %154 : vector<8x128xf32>
    %156 = arith.mulf %147, %127 : vector<8x128xf32>
    %157 = arith.mulf %141, %149 : vector<8x128xf32>
    %158 = arith.addf %156, %157 : vector<8x128xf32>
    %159 = math.tanh %158 : vector<8x128xf32>
    %160 = arith.mulf %155, %159 : vector<8x128xf32>
    %c5_i32 = arith.constant 5 : i32
    %161 = arith.index_cast %c5_i32 : i32 to index
    %c0_36 = arith.constant 0 : index
    %c0_37 = arith.constant 0 : index
    %162 = vector.load %arg2[%161, %c0_36, %c0_37] : memref<8x8x512xf32, #tpu.memory_space<vmem>>, vector<1x8x512xf32>
    %163 = vector.shape_cast %162 : vector<1x8x512xf32> to vector<8x512xf32>
    %164 = arith.truncf %160 : vector<8x128xf32> to vector<8x128xbf16>
    %cst_38 = arith.constant dense<0.000000e+00> : vector<8x512xf32>
    %165 = tpu.matmul %164, %3, %cst_38 {dimension_numbers = #tpu.dot_dimension_numbers<[1], [0], [0], [1], [0, 0, 1, 1], [], []>} : vector<8x128xbf16>, vector<128x512xbf16>, vector<8x512xf32> -> vector<8x512xf32>
    %166 = arith.addf %163, %165 : vector<8x512xf32>
    %167 = vector.extract_strided_slice %166 {offsets = [0, 0], sizes = [8, 128], strides = [1, 1]} : vector<8x512xf32> to vector<8x128xf32>
    %168 = arith.negf %167 : vector<8x128xf32>
    %169 = math.exp %168 : vector<8x128xf32>
    %cst_39 = arith.constant 1.000000e+00 : f32
    %170 = vector.broadcast %cst_39 : f32 to vector<8x128xf32>
    %171 = arith.addf %170, %169 : vector<8x128xf32>
    %172 = arith.divf %170, %171 : vector<8x128xf32>
    %173 = vector.extract_strided_slice %166 {offsets = [0, 128], sizes = [8, 128], strides = [1, 1]} : vector<8x512xf32> to vector<8x128xf32>
    %174 = arith.negf %173 : vector<8x128xf32>
    %175 = math.exp %174 : vector<8x128xf32>
    %cst_40 = arith.constant 1.000000e+00 : f32
    %176 = vector.broadcast %cst_40 : f32 to vector<8x128xf32>
    %177 = arith.addf %176, %175 : vector<8x128xf32>
    %178 = arith.divf %176, %177 : vector<8x128xf32>
    %179 = vector.extract_strided_slice %166 {offsets = [0, 256], sizes = [8, 128], strides = [1, 1]} : vector<8x512xf32> to vector<8x128xf32>
    %180 = math.tanh %179 : vector<8x128xf32>
    %181 = vector.extract_strided_slice %166 {offsets = [0, 384], sizes = [8, 128], strides = [1, 1]} : vector<8x512xf32> to vector<8x128xf32>
    %182 = arith.negf %181 : vector<8x128xf32>
    %183 = math.exp %182 : vector<8x128xf32>
    %cst_41 = arith.constant 1.000000e+00 : f32
    %184 = vector.broadcast %cst_41 : f32 to vector<8x128xf32>
    %185 = arith.addf %184, %183 : vector<8x128xf32>
    %186 = arith.divf %184, %185 : vector<8x128xf32>
    %187 = arith.mulf %178, %158 : vector<8x128xf32>
    %188 = arith.mulf %172, %180 : vector<8x128xf32>
    %189 = arith.addf %187, %188 : vector<8x128xf32>
    %190 = math.tanh %189 : vector<8x128xf32>
    %191 = arith.mulf %186, %190 : vector<8x128xf32>
    %c6_i32 = arith.constant 6 : i32
    %192 = arith.index_cast %c6_i32 : i32 to index
    %c0_42 = arith.constant 0 : index
    %c0_43 = arith.constant 0 : index
    %193 = vector.load %arg2[%192, %c0_42, %c0_43] : memref<8x8x512xf32, #tpu.memory_space<vmem>>, vector<1x8x512xf32>
    %194 = vector.shape_cast %193 : vector<1x8x512xf32> to vector<8x512xf32>
    %195 = arith.truncf %191 : vector<8x128xf32> to vector<8x128xbf16>
    %cst_44 = arith.constant dense<0.000000e+00> : vector<8x512xf32>
    %196 = tpu.matmul %195, %3, %cst_44 {dimension_numbers = #tpu.dot_dimension_numbers<[1], [0], [0], [1], [0, 0, 1, 1], [], []>} : vector<8x128xbf16>, vector<128x512xbf16>, vector<8x512xf32> -> vector<8x512xf32>
    %197 = arith.addf %194, %196 : vector<8x512xf32>
    %198 = vector.extract_strided_slice %197 {offsets = [0, 0], sizes = [8, 128], strides = [1, 1]} : vector<8x512xf32> to vector<8x128xf32>
    %199 = arith.negf %198 : vector<8x128xf32>
    %200 = math.exp %199 : vector<8x128xf32>
    %cst_45 = arith.constant 1.000000e+00 : f32
    %201 = vector.broadcast %cst_45 : f32 to vector<8x128xf32>
    %202 = arith.addf %201, %200 : vector<8x128xf32>
    %203 = arith.divf %201, %202 : vector<8x128xf32>
    %204 = vector.extract_strided_slice %197 {offsets = [0, 128], sizes = [8, 128], strides = [1, 1]} : vector<8x512xf32> to vector<8x128xf32>
    %205 = arith.negf %204 : vector<8x128xf32>
    %206 = math.exp %205 : vector<8x128xf32>
    %cst_46 = arith.constant 1.000000e+00 : f32
    %207 = vector.broadcast %cst_46 : f32 to vector<8x128xf32>
    %208 = arith.addf %207, %206 : vector<8x128xf32>
    %209 = arith.divf %207, %208 : vector<8x128xf32>
    %210 = vector.extract_strided_slice %197 {offsets = [0, 256], sizes = [8, 128], strides = [1, 1]} : vector<8x512xf32> to vector<8x128xf32>
    %211 = math.tanh %210 : vector<8x128xf32>
    %212 = vector.extract_strided_slice %197 {offsets = [0, 384], sizes = [8, 128], strides = [1, 1]} : vector<8x512xf32> to vector<8x128xf32>
    %213 = arith.negf %212 : vector<8x128xf32>
    %214 = math.exp %213 : vector<8x128xf32>
    %cst_47 = arith.constant 1.000000e+00 : f32
    %215 = vector.broadcast %cst_47 : f32 to vector<8x128xf32>
    %216 = arith.addf %215, %214 : vector<8x128xf32>
    %217 = arith.divf %215, %216 : vector<8x128xf32>
    %218 = arith.mulf %209, %189 : vector<8x128xf32>
    %219 = arith.mulf %203, %211 : vector<8x128xf32>
    %220 = arith.addf %218, %219 : vector<8x128xf32>
    %221 = math.tanh %220 : vector<8x128xf32>
    %222 = arith.mulf %217, %221 : vector<8x128xf32>
    %c7_i32 = arith.constant 7 : i32
    %223 = arith.index_cast %c7_i32 : i32 to index
    %c0_48 = arith.constant 0 : index
    %c0_49 = arith.constant 0 : index
    %224 = vector.load %arg2[%223, %c0_48, %c0_49] : memref<8x8x512xf32, #tpu.memory_space<vmem>>, vector<1x8x512xf32>
    %225 = vector.shape_cast %224 : vector<1x8x512xf32> to vector<8x512xf32>
    %226 = arith.truncf %222 : vector<8x128xf32> to vector<8x128xbf16>
    %cst_50 = arith.constant dense<0.000000e+00> : vector<8x512xf32>
    %227 = tpu.matmul %226, %3, %cst_50 {dimension_numbers = #tpu.dot_dimension_numbers<[1], [0], [0], [1], [0, 0, 1, 1], [], []>} : vector<8x128xbf16>, vector<128x512xbf16>, vector<8x512xf32> -> vector<8x512xf32>
    %228 = arith.addf %225, %227 : vector<8x512xf32>
    %229 = vector.extract_strided_slice %228 {offsets = [0, 0], sizes = [8, 128], strides = [1, 1]} : vector<8x512xf32> to vector<8x128xf32>
    %230 = arith.negf %229 : vector<8x128xf32>
    %231 = math.exp %230 : vector<8x128xf32>
    %cst_51 = arith.constant 1.000000e+00 : f32
    %232 = vector.broadcast %cst_51 : f32 to vector<8x128xf32>
    %233 = arith.addf %232, %231 : vector<8x128xf32>
    %234 = arith.divf %232, %233 : vector<8x128xf32>
    %235 = vector.extract_strided_slice %228 {offsets = [0, 128], sizes = [8, 128], strides = [1, 1]} : vector<8x512xf32> to vector<8x128xf32>
    %236 = arith.negf %235 : vector<8x128xf32>
    %237 = math.exp %236 : vector<8x128xf32>
    %cst_52 = arith.constant 1.000000e+00 : f32
    %238 = vector.broadcast %cst_52 : f32 to vector<8x128xf32>
    %239 = arith.addf %238, %237 : vector<8x128xf32>
    %240 = arith.divf %238, %239 : vector<8x128xf32>
    %241 = vector.extract_strided_slice %228 {offsets = [0, 256], sizes = [8, 128], strides = [1, 1]} : vector<8x512xf32> to vector<8x128xf32>
    %242 = math.tanh %241 : vector<8x128xf32>
    %243 = vector.extract_strided_slice %228 {offsets = [0, 384], sizes = [8, 128], strides = [1, 1]} : vector<8x512xf32> to vector<8x128xf32>
    %244 = arith.negf %243 : vector<8x128xf32>
    %245 = math.exp %244 : vector<8x128xf32>
    %cst_53 = arith.constant 1.000000e+00 : f32
    %246 = vector.broadcast %cst_53 : f32 to vector<8x128xf32>
    %247 = arith.addf %246, %245 : vector<8x128xf32>
    %248 = arith.divf %246, %247 : vector<8x128xf32>
    %249 = arith.mulf %240, %220 : vector<8x128xf32>
    %250 = arith.mulf %234, %242 : vector<8x128xf32>
    %251 = arith.addf %249, %250 : vector<8x128xf32>
    %252 = math.tanh %251 : vector<8x128xf32>
    %253 = arith.mulf %248, %252 : vector<8x128xf32>
    %c8_i32 = arith.constant 8 : i32
    %c0_54 = arith.constant 0 : index
    %c0_55 = arith.constant 0 : index
    %254 = vector.load %arg9[%c0_54, %c0_55] : memref<8x128xf32, #tpu.memory_space<vmem>>, vector<8x128xf32>
    tpu.vector_store %arg9[%c0_54, %c0_55], %253 {strides = array<i32>} : memref<8x128xf32, #tpu.memory_space<vmem>>, vector<8x128xf32>,
    %c0_56 = arith.constant 0 : index
    %c0_57 = arith.constant 0 : index
    %255 = vector.load %arg10[%c0_56, %c0_57] : memref<8x128xf32, #tpu.memory_space<vmem>>, vector<8x128xf32>
    tpu.vector_store %arg10[%c0_56, %c0_57], %251 {strides = array<i32>} : memref<8x128xf32, #tpu.memory_space<vmem>>, vector<8x128xf32>,
    %c0_i32_58 = arith.constant 0 : i32
    %256 = arith.cmpi eq, %arg1, %c0_i32_58 : i32
    %257 = arith.extui %256 : i1 to i32
    %c0_i32_59 = arith.constant 0 : i32
    %258 = arith.cmpi ne, %257, %c0_i32_59 : i32
    scf.if %258 {
      %259 = arith.truncf %253 : vector<8x128xf32> to vector<8x128xbf16>
      %c0_60 = arith.constant 0 : index
      %c0_61 = arith.constant 0 : index
      %260 = vector.load %arg4[%c0_60, %c0_61] : memref<128x256xbf16, #tpu.memory_space<vmem>>, vector<128x256xbf16>
      %cst_62 = arith.constant dense<0.000000e+00> : vector<8x256xf32>
      %261 = tpu.matmul %259, %260, %cst_62 {dimension_numbers = #tpu.dot_dimension_numbers<[1], [0], [0], [1], [0, 0, 1, 1], [], []>} : vector<8x128xbf16>, vector<128x256xbf16>, vector<8x256xf32> -> vector<8x256xf32>
      %c0_63 = arith.constant 0 : index
      %c0_64 = arith.constant 0 : index
      %262 = vector.load %arg5[%c0_63, %c0_64] : memref<1x256xf32, #tpu.memory_space<vmem>>, vector<1x256xf32>
      %263 = vector.broadcast %262 : vector<1x256xf32> to vector<8x256xf32>
      %264 = arith.addf %261, %263 : vector<8x256xf32>
      %cst_65 = arith.constant 0.000000e+00 : f32
      %265 = vector.broadcast %cst_65 : f32 to vector<8x256xf32>
      %266 = arith.maximumf %264, %265 : vector<8x256xf32>
      %267 = arith.truncf %266 : vector<8x256xf32> to vector<8x256xbf16>
      %c0_66 = arith.constant 0 : index
      %c0_67 = arith.constant 0 : index
      %268 = vector.load %arg6[%c0_66, %c0_67] : memref<256x128xbf16, #tpu.memory_space<vmem>>, vector<256x128xbf16>
      %cst_68 = arith.constant dense<0.000000e+00> : vector<8x128xf32>
      %269 = tpu.matmul %267, %268, %cst_68 {dimension_numbers = #tpu.dot_dimension_numbers<[1], [0], [0], [1], [0, 0, 1, 1], [], []>} : vector<8x256xbf16>, vector<256x128xbf16>, vector<8x128xf32> -> vector<8x128xf32>
      %c0_69 = arith.constant 0 : index
      %c0_70 = arith.constant 0 : index
      %270 = vector.load %arg7[%c0_69, %c0_70] : memref<1x128xf32, #tpu.memory_space<vmem>>, vector<1x128xf32>
      %271 = vector.broadcast %270 : vector<1x128xf32> to vector<8x128xf32>
      %272 = arith.addf %269, %271 : vector<8x128xf32>
      %c0_71 = arith.constant 0 : index
      %c0_72 = arith.constant 0 : index
      %273 = vector.load %arg8[%c0_71, %c0_72] : memref<8x128xf32, #tpu.memory_space<vmem>>, vector<8x128xf32>
      tpu.vector_store %arg8[%c0_71, %c0_72], %272 {strides = array<i32>} : memref<8x128xf32, #tpu.memory_space<vmem>>, vector<8x128xf32>,
    } else {
    }
    return
  }
  func.func @transform_0(%arg0: i32, %arg1: i32) -> (i32, i32, i32) {
    %c0_i32 = arith.constant 0 : i32
    %c0_i32_0 = arith.constant 0 : i32
    return %arg1, %arg0, %c0_i32 : i32, i32, i32
  }
  func.func @transform_1(%arg0: i32, %arg1: i32) -> (i32, i32) {
    %c0_i32 = arith.constant 0 : i32
    %c0_i32_0 = arith.constant 0 : i32
    %c0_i32_1 = arith.constant 0 : i32
    return %c0_i32, %c0_i32_0 : i32, i32
  }
  func.func @transform_2(%arg0: i32, %arg1: i32) -> (i32, i32) {
    %c0_i32 = arith.constant 0 : i32
    %c0_i32_0 = arith.constant 0 : i32
    %c0_i32_1 = arith.constant 0 : i32
    return %c0_i32, %c0_i32_0 : i32, i32
  }
  func.func @transform_3(%arg0: i32, %arg1: i32) -> (i32, i32) {
    %c0_i32 = arith.constant 0 : i32
    %c0_i32_0 = arith.constant 0 : i32
    %c0_i32_1 = arith.constant 0 : i32
    return %c0_i32, %c0_i32_0 : i32, i32
  }
  func.func @transform_4(%arg0: i32, %arg1: i32) -> (i32, i32) {
    %c0_i32 = arith.constant 0 : i32
    %c0_i32_0 = arith.constant 0 : i32
    %c0_i32_1 = arith.constant 0 : i32
    return %c0_i32, %c0_i32_0 : i32, i32
  }
  func.func @transform_5(%arg0: i32, %arg1: i32) -> (i32, i32) {
    %c0_i32 = arith.constant 0 : i32
    %c0_i32_0 = arith.constant 0 : i32
    %c0_i32_1 = arith.constant 0 : i32
    return %c0_i32, %c0_i32_0 : i32, i32
  }
  func.func @transform_6(%arg0: i32, %arg1: i32) -> (i32, i32) {
    %c0_i32 = arith.constant 0 : i32
    %c0_i32_0 = arith.constant 0 : i32
    return %arg0, %c0_i32 : i32, i32
  }
}

</mosaic_0001>

<llo_original>
// kernel: tpu_custom_call.1
$region0: #{tpu_custom_call.1}
  #allocation0 [shape = 'u32[]', space=smem, size = 0x4, offset = 0x4, fixed_abs, tag = 'smem constant byte address 0x4 - core index']
  #allocation1 [shape = 'u32[72,128]{1,0:T(1,128)}', space=vmem, size = 0x9000, scoped, tag = 'internal scratch']
  #allocation2 [shape = 'f32[8,128]{1,0:T(8,128)}', space=vmem, size = 0x1000, scoped, tag = 'scratch operand']
  #allocation3 [shape = 'f32[8,128]{1,0:T(8,128)}', space=vmem, size = 0x1000, scoped, tag = 'scratch operand']
  %s0 = inlined_call_operand.hbm [shape: f32[8,8,512], index: 0, kind: input, shape index: {}]
  %s1 = inlined_call_operand.hbm [shape: bf16[128,512], index: 1, kind: input, shape index: {}]
  %s2 = inlined_call_operand.hbm [shape: bf16[128,256], index: 2, kind: input, shape index: {}]
  %s3 = inlined_call_operand.vmem [shape: f32[1,256], index: 3, kind: input, shape index: {}]
  %s4 = inlined_call_operand.hbm [shape: bf16[256,128], index: 4, kind: input, shape index: {}]
  %s5 = inlined_call_operand.vmem [shape: f32[1,128], index: 5, kind: input, shape index: {}]
  %s6 = inlined_call_operand.hbm [shape: f32[8,128], index: 6, kind: output, shape index: {}]
  %s7 = sld [smem:[#allocation0]]
  $region58: #{tpu_custom_call.1} parent=0
    _
  %s9 = ssub.s32 1, %s7
  %s10 = scalar_select 0, %s9, %s7
  $region1: #{tpu_custom_call.1} parent=0
    #allocation4 [shape = 'u8[131072]{0}', space=vmem, size = 0x20000, scoped, tag = 'input window, operand 0, single buffered']
    #allocation5 [shape = 's32[1]{0}', space=sflag, size = 0x4, scoped, tag = 'scoped memory for tpu_custom_call.1']
    #allocation6 [shape = 's32[1]{0}', space=sflag, size = 0x4, scoped, tag = 'scoped memory for tpu_custom_call.1']
    #allocation7 [shape = 'u8[131072]{0}', space=vmem, size = 0x20000, scoped, tag = 'input window, operand 1, single buffered']
    #allocation8 [shape = 's32[1]{0}', space=sflag, size = 0x4, scoped, tag = 'scoped memory for tpu_custom_call.1']
    #allocation9 [shape = 'u8[65536]{0}', space=vmem, size = 0x10000, scoped, tag = 'input window, operand 2, single buffered']
    #allocation10 [shape = 'u8[65536]{0}', space=vmem, size = 0x10000, scoped, tag = 'input window, operand 4, single buffered']
    #allocation11 [shape = 's32[1]{0}', space=sflag, size = 0x4, scoped, tag = 'scoped memory for tpu_custom_call.1']
    #allocation12 [shape = 'u8[4096]{0}', space=vmem, size = 0x1000, scoped, tag = 'output window, operand 0, single buffered']
    %11 = vsyncpa [#allocation5], 0
    %12 = vsyncpa [#allocation8], 0
    %13 = vsyncpa [#allocation11], 0
    %14 = vsyncpa [#allocation6], 0
    // Predicated region
    $region2: #{tpu_custom_call.1} parent=1 // pred_check
      _
    $region3: #{tpu_custom_call.1} parent=1 // pred_check_branch
      %16 = sbr.rel (0) target = $region5
    $region4: #{tpu_custom_call.1} parent=1 // pred_region
      %18 = vsyncadd [#allocation5], 0
      %s19 = sshll.u32 %s0, 4
      %s20 = int_to_ptr.hbm [resolvable:$true] %s19
      %s21 = sshll.u32 [#allocation4], 4
      %s22 = int_to_ptr.vmem [resolvable:$true] %s21
      %27 = dma.hbm_to_vmem [thread:$0]  %s20, 4096, %s22, [#allocation5], 512, 512, 32
    $region5: #{tpu_custom_call.1} parent=1 // pred_fallthru
      _
    // Predicated region
    $region6: #{tpu_custom_call.1} parent=1 // pred_check
      _
    $region7: #{tpu_custom_call.1} parent=1 // pred_check_branch
      %29 = sbr.rel (0) target = $region9
    $region8: #{tpu_custom_call.1} parent=1 // pred_region
      %31 = vsyncadd [#allocation8], 0
      %s32 = sshll.u32 %s1, 4
      %s33 = int_to_ptr.hbm [resolvable:$true] %s32
      %s34 = sshll.u32 [#allocation7], 4
      %s35 = int_to_ptr.vmem [resolvable:$true] %s34
      %40 = dma.hbm_to_vmem [thread:$0]  %s33, 4096, %s35, [#allocation8], 256, 256, 16
    $region9: #{tpu_custom_call.1} parent=1 // pred_fallthru
      _
    // Predicated region
    $region10: #{tpu_custom_call.1} parent=1 // pred_check
      _
    $region11: #{tpu_custom_call.1} parent=1 // pred_check_branch
      %42 = sbr.rel (0) target = $region13
    $region12: #{tpu_custom_call.1} parent=1 // pred_region
      %44 = vsyncadd [#allocation8], 0
      %s45 = sshll.u32 %s2, 4
      %s46 = int_to_ptr.hbm [resolvable:$true] %s45
      %s47 = sshll.u32 [#allocation9], 4
      %s48 = int_to_ptr.vmem [resolvable:$true] %s47
      %53 = dma.hbm_to_vmem [thread:$0]  %s46, 2048, %s48, [#allocation8], 128, 128, 8
    $region13: #{tpu_custom_call.1} parent=1 // pred_fallthru
      _
    // Predicated region
    $region14: #{tpu_custom_call.1} parent=1 // pred_check
      _
    $region15: #{tpu_custom_call.1} parent=1 // pred_check_branch
      %55 = sbr.rel (0) target = $region17
    $region16: #{tpu_custom_call.1} parent=1 // pred_region
      _
    $region17: #{tpu_custom_call.1} parent=1 // pred_fallthru
      _
    // Predicated region
    $region18: #{tpu_custom_call.1} parent=1 // pred_check
      _
    $region19: #{tpu_custom_call.1} parent=1 // pred_check_branch
      %57 = sbr.rel (0) target = $region21
    $region20: #{tpu_custom_call.1} parent=1 // pred_region
      %59 = vsyncadd [#allocation11], 0
      %s60 = sshll.u32 %s4, 4
      %s61 = int_to_ptr.hbm [resolvable:$true] %s60
      %s62 = sshll.u32 [#allocation10], 4
      %s63 = int_to_ptr.vmem [resolvable:$true] %s62
      %68 = dma.hbm_to_vmem [thread:$0]  %s61, 2048, %s63, [#allocation11], 64, 64, 4
    $region21: #{tpu_custom_call.1} parent=1 // pred_fallthru
      _
    // Predicated region
    $region22: #{tpu_custom_call.1} parent=1 // pred_check
      _
    $region23: #{tpu_custom_call.1} parent=1 // pred_check_branch
      %70 = sbr.rel (0) target = $region25
    $region24: #{tpu_custom_call.1} parent=1 // pred_region
      _
    $region25: #{tpu_custom_call.1} parent=1 // pred_fallthru
      _
    // Predicated region
    $region26: #{tpu_custom_call.1} parent=1 // pred_check
      _
    $region27: #{tpu_custom_call.1} parent=1 // pred_check_branch
      %72 = sbr.rel (0) target = $region29
    $region28: #{tpu_custom_call.1} parent=1 // pred_region
      %74 = dma.done [#allocation5], 4096
    $region29: #{tpu_custom_call.1} parent=1 // pred_fallthru
      _
    // Predicated region
    $region30: #{tpu_custom_call.1} parent=1 // pred_check
      _
    $region31: #{tpu_custom_call.1} parent=1 // pred_check_branch
      %76 = sbr.rel (0) target = $region33
    $region32: #{tpu_custom_call.1} parent=1 // pred_region
      %78 = dma.done [#allocation8], 4096
    $region33: #{tpu_custom_call.1} parent=1 // pred_fallthru
      _
    // Predicated region
    $region34: #{tpu_custom_call.1} parent=1 // pred_check
      _
    $region35: #{tpu_custom_call.1} parent=1 // pred_check_branch
      %80 = sbr.rel (0) target = $region37
    $region36: #{tpu_custom_call.1} parent=1 // pred_region
      %82 = dma.done [#allocation8], 2048
    $region37: #{tpu_custom_call.1} parent=1 // pred_fallthru
      _
    // Predicated region
    $region38: #{tpu_custom_call.1} parent=1 // pred_check
      _
    $region39: #{tpu_custom_call.1} parent=1 // pred_check_branch
      %84 = sbr.rel (0) target = $region41
    $region40: #{tpu_custom_call.1} parent=1 // pred_region
      %86 = dma.done [#allocation11], 2048
    $region41: #{tpu_custom_call.1} parent=1 // pred_fallthru
      _
    %p87 = scmp.eq.s32.totalorder 0, 0
    // Predicated region
    $region42: #{tpu_custom_call.1} parent=1 // pred_check
      %p88 = pneg %p87
    $region43: #{tpu_custom_call.1} parent=1 // pred_check_branch
      %90 = sbr.rel (%p88) target = $region45
    $region44: #{tpu_custom_call.1} parent=1 // pred_region
      %91 = vst [vmem:[#allocation2] sm:$0xff] 0.0
      %92 = vst [vmem:[#allocation3] sm:$0xff] 0.0
    $region45: #{tpu_custom_call.1} parent=1 // pred_fallthru
      _
    %v93 = vld [vmem:[#allocation7] sm:$0xff]
    %v94 = vld [vmem:[#allocation7 + $0x8] sm:$0xff]
    %v95 = vld [vmem:[#allocation7 + $0x10] sm:$0xff]
    %v96 = vld [vmem:[#allocation7 + $0x18] sm:$0xff]
    %v97 = vld [vmem:[#allocation7 + $0x20] sm:$0xff]
    %v98 = vld [vmem:[#allocation7 + $0x28] sm:$0xff]
    %v99 = vld [vmem:[#allocation7 + $0x30] sm:$0xff]
    %v100 = vld [vmem:[#allocation7 + $0x38] sm:$0xff]
    %v101 = vld [vmem:[#allocation7 + $0x40] sm:$0xff]
    %v102 = vld [vmem:[#allocation7 + $0x48] sm:$0xff]
    %v103 = vld [vmem:[#allocation7 + $0x50] sm:$0xff]
    %v104 = vld [vmem:[#allocation7 + $0x58] sm:$0xff]
    %v105 = vld [vmem:[#allocation7 + $0x60] sm:$0xff]
    %v106 = vld [vmem:[#allocation7 + $0x68] sm:$0xff]
    %v107 = vld [vmem:[#allocation7 + $0x70] sm:$0xff]
    %v108 = vld [vmem:[#allocation7 + $0x78] sm:$0xff]
    %v109 = vld [vmem:[#allocation7 + $0x80] sm:$0xff]
    %v110 = vld [vmem:[#allocation7 + $0x88] sm:$0xff]
    %v111 = vld [vmem:[#allocation7 + $0x90] sm:$0xff]
    %v112 = vld [vmem:[#allocation7 + $0x98] sm:$0xff]
    %v113 = vld [vmem:[#allocation7 + $0xa0] sm:$0xff]
    %v114 = vld [vmem:[#allocation7 + $0xa8] sm:$0xff]
    %v115 = vld [vmem:[#allocation7 + $0xb0] sm:$0xff]
    %v116 = vld [vmem:[#allocation7 + $0xb8] sm:$0xff]
    %v117 = vld [vmem:[#allocation7 + $0xc0] sm:$0xff]
    %v118 = vld [vmem:[#allocation7 + $0xc8] sm:$0xff]
    %v119 = vld [vmem:[#allocation7 + $0xd0] sm:$0xff]
    %v120 = vld [vmem:[#allocation7 + $0xd8] sm:$0xff]
    %v121 = vld [vmem:[#allocation7 + $0xe0] sm:$0xff]
    %v122 = vld [vmem:[#allocation7 + $0xe8] sm:$0xff]
    %v123 = vld [vmem:[#allocation7 + $0xf0] sm:$0xff]
    %v124 = vld [vmem:[#allocation7 + $0xf8] sm:$0xff]
    %v125 = vld [vmem:[#allocation2] sm:$0xff]
    %v126 = vld [vmem:[#allocation3] sm:$0xff]
    %v127 = vld [vmem:[#allocation4] sm:$0xff]
    %v128 = vld [vmem:[#allocation4 + $0x8] sm:$0xff]
    %v129 = vld [vmem:[#allocation4 + $0x10] sm:$0xff]
    %v130 = vld [vmem:[#allocation4 + $0x18] sm:$0xff]
    %v131 = vpack.c.bf16 %v125, %v125
    %v164 = vunpack.c.l.b16 %v93
    %v165 = vunpack.c.h.b16 %v93
    %v166 = vunpack.c.l.b16 %v94
    %v167 = vunpack.c.h.b16 %v94
    %v168 = vunpack.c.l.b16 %v95
    %v169 = vunpack.c.h.b16 %v95
    %v170 = vunpack.c.l.b16 %v96
    %v171 = vunpack.c.h.b16 %v96
    %v172 = vunpack.c.l.b16 %v97
    %v173 = vunpack.c.h.b16 %v97
    %v174 = vunpack.c.l.b16 %v98
    %v175 = vunpack.c.h.b16 %v98
    %v176 = vunpack.c.l.b16 %v99
    %v177 = vunpack.c.h.b16 %v99
    %v178 = vunpack.c.l.b16 %v100
    %v179 = vunpack.c.h.b16 %v100
    %v180 = vunpack.c.l.b16 %v101
    %v181 = vunpack.c.h.b16 %v101
    %v182 = vunpack.c.l.b16 %v102
    %v183 = vunpack.c.h.b16 %v102
    %v184 = vunpack.c.l.b16 %v103
    %v185 = vunpack.c.h.b16 %v103
    %v186 = vunpack.c.l.b16 %v104
    %v187 = vunpack.c.h.b16 %v104
    %v188 = vunpack.c.l.b16 %v105
    %v189 = vunpack.c.h.b16 %v105
    %v190 = vunpack.c.l.b16 %v106
    %v191 = vunpack.c.h.b16 %v106
    %v192 = vunpack.c.l.b16 %v107
    %v193 = vunpack.c.h.b16 %v107
    %v194 = vunpack.c.l.b16 %v108
    %v195 = vunpack.c.h.b16 %v108
    %v196 = vunpack.c.l.b16 %v109
    %v197 = vunpack.c.h.b16 %v109
    %v198 = vunpack.c.l.b16 %v110
    %v199 = vunpack.c.h.b16 %v110
    %v200 = vunpack.c.l.b16 %v111
    %v201 = vunpack.c.h.b16 %v111
    %v202 = vunpack.c.l.b16 %v112
    %v203 = vunpack.c.h.b16 %v112
    %v204 = vunpack.c.l.b16 %v113
    %v205 = vunpack.c.h.b16 %v113
    %v206 = vunpack.c.l.b16 %v114
    %v207 = vunpack.c.h.b16 %v114
    %v208 = vunpack.c.l.b16 %v115
    %v209 = vunpack.c.h.b16 %v115
    %v210 = vunpack.c.l.b16 %v116
    %v211 = vunpack.c.h.b16 %v116
    %v212 = vunpack.c.l.b16 %v117
    %v213 = vunpack.c.h.b16 %v117
    %v214 = vunpack.c.l.b16 %v118
    %v215 = vunpack.c.h.b16 %v118
    %v216 = vunpack.c.l.b16 %v119
    %v217 = vunpack.c.h.b16 %v119
    %v218 = vunpack.c.l.b16 %v120
    %v219 = vunpack.c.h.b16 %v120
    %v220 = vunpack.c.l.b16 %v121
    %v221 = vunpack.c.h.b16 %v121
    %v222 = vunpack.c.l.b16 %v122
    %v223 = vunpack.c.h.b16 %v122
    %v224 = vunpack.c.l.b16 %v123
    %v225 = vunpack.c.h.b16 %v123
    %v226 = vunpack.c.l.b16 %v124
    %v227 = vunpack.c.h.b16 %v124
    %v228 = vpack.c.b16 %v168, %v164
    %v229 = vpack.c.b16 %v169, %v165
    %v230 = vpack.c.b16 %v170, %v166
    %v231 = vpack.c.b16 %v171, %v167
    %v232 = vpack.c.b16 %v176, %v172
    %v233 = vpack.c.b16 %v177, %v173
    %v234 = vpack.c.b16 %v178, %v174
    %v235 = vpack.c.b16 %v179, %v175
    %v236 = vpack.c.b16 %v184, %v180
    %v237 = vpack.c.b16 %v185, %v181
    %v238 = vpack.c.b16 %v186, %v182
    %v239 = vpack.c.b16 %v187, %v183
    %v240 = vpack.c.b16 %v192, %v188
    %v241 = vpack.c.b16 %v193, %v189
    %v242 = vpack.c.b16 %v194, %v190
    %v243 = vpack.c.b16 %v195, %v191
    %v244 = vpack.c.b16 %v200, %v196
    %v245 = vpack.c.b16 %v201, %v197
    %v246 = vpack.c.b16 %v202, %v198
    %v247 = vpack.c.b16 %v203, %v199
    %v248 = vpack.c.b16 %v208, %v204
    %v249 = vpack.c.b16 %v209, %v205
    %v250 = vpack.c.b16 %v210, %v206
    %v251 = vpack.c.b16 %v211, %v207
    %v252 = vpack.c.b16 %v216, %v212
    %v253 = vpack.c.b16 %v217, %v213
    %v254 = vpack.c.b16 %v218, %v214
    %v255 = vpack.c.b16 %v219, %v215
    %v256 = vpack.c.b16 %v224, %v220
    %v257 = vpack.c.b16 %v225, %v221
    %v258 = vpack.c.b16 %v226, %v222
    %v259 = vpack.c.b16 %v227, %v223
    %292 = vmatpush.bf16.msra.mxu0 %v256
    %293 = vmatpush.bf16.msra.mxu0 %v252
    %294 = vmatpush.bf16.msra.mxu0 %v248
    %295 = vmatpush.bf16.msra.mxu0 %v244
    %296 = vmatpush.bf16.msra.mxu0 %v240
    %297 = vmatpush.bf16.msra.mxu0 %v236
    %298 = vmatpush.bf16.msra.mxu0 %v232
    %299 = vmatpush.bf16.msra.mxu0 %v228
    %300 = vmatmul.bf16.gmra.mxu0 %v131
    %v301 = vpop.f32.mrf.mxu0
    %v302 = vadd.f32 0.0, %v301
    %v303 = vpop.f32.mrf.mxu0
    %304 = vdwg.mxu0
    %305 = vmatpush.bf16.msra.mxu0 %v257
    %306 = vmatpush.bf16.msra.mxu0 %v253
    %307 = vmatpush.bf16.msra.mxu0 %v249
    %308 = vmatpush.bf16.msra.mxu0 %v245
    %309 = vmatpush.bf16.msra.mxu0 %v241
    %310 = vmatpush.bf16.msra.mxu0 %v237
    %311 = vmatpush.bf16.msra.mxu0 %v233
    %312 = vmatpush.bf16.msra.mxu0 %v229
    %313 = vmatmul.bf16.gmra.mxu0 %v131
    %v314 = vpop.f32.mrf.mxu0
    %v315 = vadd.f32 0.0, %v314
    %v316 = vpop.f32.mrf.mxu0
    %317 = vdwg.mxu0
    %318 = vmatpush.bf16.msra.mxu0 %v258
    %319 = vmatpush.bf16.msra.mxu0 %v254
    %320 = vmatpush.bf16.msra.mxu0 %v250
    %321 = vmatpush.bf16.msra.mxu0 %v246
    %322 = vmatpush.bf16.msra.mxu0 %v242
    %323 = vmatpush.bf16.msra.mxu0 %v238
    %324 = vmatpush.bf16.msra.mxu0 %v234
    %325 = vmatpush.bf16.msra.mxu0 %v230
    %326 = vmatmul.bf16.gmra.mxu0 %v131
    %v327 = vpop.f32.mrf.mxu0
    %v328 = vadd.f32 0.0, %v327
    %v329 = vpop.f32.mrf.mxu0
    %330 = vdwg.mxu0
    %331 = vmatpush.bf16.msra.mxu0 %v259
    %332 = vmatpush.bf16.msra.mxu0 %v255
    %333 = vmatpush.bf16.msra.mxu0 %v251
    %334 = vmatpush.bf16.msra.mxu0 %v247
    %335 = vmatpush.bf16.msra.mxu0 %v243
    %336 = vmatpush.bf16.msra.mxu0 %v239
    %337 = vmatpush.bf16.msra.mxu0 %v235
    %338 = vmatpush.bf16.msra.mxu0 %v231
    %339 = vmatmul.bf16.gmra.mxu0 %v131
    %v340 = vpop.f32.mrf.mxu0
    %v341 = vadd.f32 0.0, %v340
    %v342 = vpop.f32.mrf.mxu0
    %343 = vdwg.mxu0
    %v344 = vadd.f32 %v127, %v302
    %v345 = vadd.f32 %v128, %v315
    %v346 = vadd.f32 %v129, %v328
    %v347 = vadd.f32 %v130, %v341
    %v348 = vxor.u32 %v344, 2147483648
    %v349 = vmul.f32 %v348, 1.442695
    %v350 = vpow.pop %v349
    %v351 = vadd.f32 %v350, 1.0
    %v352 = vrcp.pop %v351
    %v353 = vmul.f32 %v351, %v352
    %v354 = vsub.f32 1.0, %v353
    %v355 = vmul.f32 %v352, %v354
    %v356 = vadd.f32 %v352, %v355
    %vm357 = vweird.f32 %v351
    %vm358 = vweird.f32 %v352
    %vm359 = vmor %vm357, %vm358
    %v360 = vsel %vm359, %v352, %v356
    %v361 = vand.u32 2147483647, %v351
    %vm362 = vcmp.eq.f32.partialorder %v361, 8.507059e+37
    %v363 = vand.u32 %v351, 2147483648
    %v364 = vor.u32 1.1754944e-38, %v363
    %v365 = vsel %vm362, %v364, %v360
    %v366 = vmul.f32 1.0, %v365
    %v367 = vxor.u32 %v345, 2147483648
    %v368 = vmul.f32 %v367, 1.442695
    %v369 = vpow.pop %v368
    %v370 = vadd.f32 %v369, 1.0
    %v371 = vrcp.pop %v370
    %v372 = vmul.f32 %v370, %v371
    %v373 = vsub.f32 1.0, %v372
    %v374 = vmul.f32 %v371, %v373
    %v375 = vadd.f32 %v371, %v374
    %vm376 = vweird.f32 %v370
    %vm377 = vweird.f32 %v371
    %vm378 = vmor %vm376, %vm377
    %v379 = vsel %vm378, %v371, %v375
    %v380 = vand.u32 2147483647, %v370
    %vm381 = vcmp.eq.f32.partialorder %v380, 8.507059e+37
    %v382 = vand.u32 %v370, 2147483648
    %v383 = vor.u32 1.1754944e-38, %v382
    %v384 = vsel %vm381, %v383, %v379
    %v385 = vmul.f32 1.0, %v384
    %v386 = vtanh.pop %v346
    %v387 = vxor.u32 %v347, 2147483648
    %v388 = vmul.f32 %v387, 1.442695
    %v389 = vpow.pop %v388
    %v390 = vadd.f32 %v389, 1.0
    %v391 = vrcp.pop %v390
    %v392 = vmul.f32 %v390, %v391
    %v393 = vsub.f32 1.0, %v392
    %v394 = vmul.f32 %v391, %v393
    %v395 = vadd.f32 %v391, %v394
    %vm396 = vweird.f32 %v390
    %vm397 = vweird.f32 %v391
    %vm398 = vmor %vm396, %vm397
    %v399 = vsel %vm398, %v391, %v395
    %v400 = vand.u32 2147483647, %v390
    %vm401 = vcmp.eq.f32.partialorder %v400, 8.507059e+37
    %v402 = vand.u32 %v390, 2147483648
    %v403 = vor.u32 1.1754944e-38, %v402
    %v404 = vsel %vm401, %v403, %v399
    %v405 = vmul.f32 1.0, %v404
    %v406 = vmul.f32 %v385, %v126
    %v407 = vmul.f32 %v366, %v386
    %v408 = vadd.f32 %v406, %v407
    %v409 = vtanh.pop %v408
    %v410 = vmul.f32 %v405, %v409
    %s411 = scalar_lea.vmem [#allocation4], 32
    %v412 = vld [vmem:[%s411] sm:$0xff]
    %v413 = vld [vmem:[%s411 + $0x8] sm:$0xff]
    %v414 = vld [vmem:[%s411 + $0x10] sm:$0xff]
    %v415 = vld [vmem:[%s411 + $0x18] sm:$0xff]
    %v416 = vpack.c.bf16 %v410, %v410
    %417 = vmatpush.bf16.msra.mxu0 %v256
    %418 = vmatpush.bf16.msra.mxu0 %v252
    %419 = vmatpush.bf16.msra.mxu0 %v248
    %420 = vmatpush.bf16.msra.mxu0 %v244
    %421 = vmatpush.bf16.msra.mxu0 %v240
    %422 = vmatpush.bf16.msra.mxu0 %v236
    %423 = vmatpush.bf16.msra.mxu0 %v232
    %424 = vmatpush.bf16.msra.mxu0 %v228
    %425 = vmatmul.bf16.gmra.mxu0 %v416
    %v426 = vpop.f32.mrf.mxu0
    %v427 = vadd.f32 0.0, %v426
    %v428 = vpop.f32.mrf.mxu0
    %429 = vdwg.mxu0
    %430 = vmatpush.bf16.msra.mxu0 %v257
    %431 = vmatpush.bf16.msra.mxu0 %v253
    %432 = vmatpush.bf16.msra.mxu0 %v249
    %433 = vmatpush.bf16.msra.mxu0 %v245
    %434 = vmatpush.bf16.msra.mxu0 %v241
    %435 = vmatpush.bf16.msra.mxu0 %v237
    %436 = vmatpush.bf16.msra.mxu0 %v233
    %437 = vmatpush.bf16.msra.mxu0 %v229
    %438 = vmatmul.bf16.gmra.mxu0 %v416
    %v439 = vpop.f32.mrf.mxu0
    %v440 = vadd.f32 0.0, %v439
    %v441 = vpop.f32.mrf.mxu0
    %442 = vdwg.mxu0
    %443 = vmatpush.bf16.msra.mxu0 %v258
    %444 = vmatpush.bf16.msra.mxu0 %v254
    %445 = vmatpush.bf16.msra.mxu0 %v250
    %446 = vmatpush.bf16.msra.mxu0 %v246
    %447 = vmatpush.bf16.msra.mxu0 %v242
    %448 = vmatpush.bf16.msra.mxu0 %v238
    %449 = vmatpush.bf16.msra.mxu0 %v234
    %450 = vmatpush.bf16.msra.mxu0 %v230
    %451 = vmatmul.bf16.gmra.mxu0 %v416
    %v452 = vpop.f32.mrf.mxu0
    %v453 = vadd.f32 0.0, %v452
    %v454 = vpop.f32.mrf.mxu0
    %455 = vdwg.mxu0
    %456 = vmatpush.bf16.msra.mxu0 %v259
    %457 = vmatpush.bf16.msra.mxu0 %v255
    %458 = vmatpush.bf16.msra.mxu0 %v251
    %459 = vmatpush.bf16.msra.mxu0 %v247
    %460 = vmatpush.bf16.msra.mxu0 %v243
    %461 = vmatpush.bf16.msra.mxu0 %v239
    %462 = vmatpush.bf16.msra.mxu0 %v235
    %463 = vmatpush.bf16.msra.mxu0 %v231
    %464 = vmatmul.bf16.gmra.mxu0 %v416
    %v465 = vpop.f32.mrf.mxu0
    %v466 = vadd.f32 0.0, %v465
    %v467 = vpop.f32.mrf.mxu0
    %468 = vdwg.mxu0
    %v469 = vadd.f32 %v412, %v427
    %v470 = vadd.f32 %v413, %v440
    %v471 = vadd.f32 %v414, %v453
    %v472 = vadd.f32 %v415, %v466
    %v473 = vxor.u32 %v469, 2147483648
    %v474 = vmul.f32 %v473, 1.442695
    %v475 = vpow.pop %v474
    %v476 = vadd.f32 %v475, 1.0
    %v477 = vrcp.pop %v476
    %v478 = vmul.f32 %v476, %v477
    %v479 = vsub.f32 1.0, %v478
    %v480 = vmul.f32 %v477, %v479
    %v481 = vadd.f32 %v477, %v480
    %vm482 = vweird.f32 %v476
    %vm483 = vweird.f32 %v477
    %vm484 = vmor %vm482, %vm483
    %v485 = vsel %vm484, %v477, %v481
    %v486 = vand.u32 2147483647, %v476
    %vm487 = vcmp.eq.f32.partialorder %v486, 8.507059e+37
    %v488 = vand.u32 %v476, 2147483648
    %v489 = vor.u32 1.1754944e-38, %v488
    %v490 = vsel %vm487, %v489, %v485
    %v491 = vmul.f32 1.0, %v490
    %v492 = vxor.u32 %v470, 2147483648
    %v493 = vmul.f32 %v492, 1.442695
    %v494 = vpow.pop %v493
    %v495 = vadd.f32 %v494, 1.0
    %v496 = vrcp.pop %v495
    %v497 = vmul.f32 %v495, %v496
    %v498 = vsub.f32 1.0, %v497
    %v499 = vmul.f32 %v496, %v498
    %v500 = vadd.f32 %v496, %v499
    %vm501 = vweird.f32 %v495
    %vm502 = vweird.f32 %v496
    %vm503 = vmor %vm501, %vm502
    %v504 = vsel %vm503, %v496, %v500
    %v505 = vand.u32 2147483647, %v495
    %vm506 = vcmp.eq.f32.partialorder %v505, 8.507059e+37
    %v507 = vand.u32 %v495, 2147483648
    %v508 = vor.u32 1.1754944e-38, %v507
    %v509 = vsel %vm506, %v508, %v504
    %v510 = vmul.f32 1.0, %v509
    %v511 = vtanh.pop %v471
    %v512 = vxor.u32 %v472, 2147483648
    %v513 = vmul.f32 %v512, 1.442695
    %v514 = vpow.pop %v513
    %v515 = vadd.f32 %v514, 1.0
    %v516 = vrcp.pop %v515
    %v517 = vmul.f32 %v515, %v516
    %v518 = vsub.f32 1.0, %v517
    %v519 = vmul.f32 %v516, %v518
    %v520 = vadd.f32 %v516, %v519
    %vm521 = vweird.f32 %v515
    %vm522 = vweird.f32 %v516
    %vm523 = vmor %vm521, %vm522
    %v524 = vsel %vm523, %v516, %v520
    %v525 = vand.u32 2147483647, %v515
    %vm526 = vcmp.eq.f32.partialorder %v525, 8.507059e+37
    %v527 = vand.u32 %v515, 2147483648
    %v528 = vor.u32 1.1754944e-38, %v527
    %v529 = vsel %vm526, %v528, %v524
    %v530 = vmul.f32 1.0, %v529
    %v531 = vmul.f32 %v510, %v408
    %v532 = vmul.f32 %v491, %v511
    %v533 = vadd.f32 %v531, %v532
    %v534 = vtanh.pop %v533
    %v535 = vmul.f32 %v530, %v534
    %s536 = scalar_lea.vmem [#allocation4], 64
    %v537 = vld [vmem:[%s536] sm:$0xff]
    %v538 = vld [vmem:[%s536 + $0x8] sm:$0xff]
    %v539 = vld [vmem:[%s536 + $0x10] sm:$0xff]
    %v540 = vld [vmem:[%s536 + $0x18] sm:$0xff]
    %v541 = vpack.c.bf16 %v535, %v535
    %542 = vmatpush.bf16.msra.mxu0 %v256
    %543 = vmatpush.bf16.msra.mxu0 %v252
    %544 = vmatpush.bf16.msra.mxu0 %v248
    %545 = vmatpush.bf16.msra.mxu0 %v244
    %546 = vmatpush.bf16.msra.mxu0 %v240
    %547 = vmatpush.bf16.msra.mxu0 %v236
    %548 = vmatpush.bf16.msra.mxu0 %v232
    %549 = vmatpush.bf16.msra.mxu0 %v228
    %550 = vmatmul.bf16.gmra.mxu0 %v541
    %v551 = vpop.f32.mrf.mxu0
    %v552 = vadd.f32 0.0, %v551
    %v553 = vpop.f32.mrf.mxu0
    %554 = vdwg.mxu0
    %555 = vmatpush.bf16.msra.mxu0 %v257
    %556 = vmatpush.bf16.msra.mxu0 %v253
    %557 = vmatpush.bf16.msra.mxu0 %v249
    %558 = vmatpush.bf16.msra.mxu0 %v245
    %559 = vmatpush.bf16.msra.mxu0 %v241
    %560 = vmatpush.bf16.msra.mxu0 %v237
    %561 = vmatpush.bf16.msra.mxu0 %v233
    %562 = vmatpush.bf16.msra.mxu0 %v229
    %563 = vmatmul.bf16.gmra.mxu0 %v541
    %v564 = vpop.f32.mrf.mxu0
    %v565 = vadd.f32 0.0, %v564
    %v566 = vpop.f32.mrf.mxu0
    %567 = vdwg.mxu0
    %568 = vmatpush.bf16.msra.mxu0 %v258
    %569 = vmatpush.bf16.msra.mxu0 %v254
    %570 = vmatpush.bf16.msra.mxu0 %v250
    %571 = vmatpush.bf16.msra.mxu0 %v246
    %572 = vmatpush.bf16.msra.mxu0 %v242
    %573 = vmatpush.bf16.msra.mxu0 %v238
    %574 = vmatpush.bf16.msra.mxu0 %v234
    %575 = vmatpush.bf16.msra.mxu0 %v230
    %576 = vmatmul.bf16.gmra.mxu0 %v541
    %v577 = vpop.f32.mrf.mxu0
    %v578 = vadd.f32 0.0, %v577
    %v579 = vpop.f32.mrf.mxu0
    %580 = vdwg.mxu0
    %581 = vmatpush.bf16.msra.mxu0 %v259
    %582 = vmatpush.bf16.msra.mxu0 %v255
    %583 = vmatpush.bf16.msra.mxu0 %v251
    %584 = vmatpush.bf16.msra.mxu0 %v247
    %585 = vmatpush.bf16.msra.mxu0 %v243
    %586 = vmatpush.bf16.msra.mxu0 %v239
    %587 = vmatpush.bf16.msra.mxu0 %v235
    %588 = vmatpush.bf16.msra.mxu0 %v231
    %589 = vmatmul.bf16.gmra.mxu0 %v541
    %v590 = vpop.f32.mrf.mxu0
    %v591 = vadd.f32 0.0, %v590
    %v592 = vpop.f32.mrf.mxu0
    %593 = vdwg.mxu0
    %v594 = vadd.f32 %v537, %v552
    %v595 = vadd.f32 %v538, %v565
    %v596 = vadd.f32 %v539, %v578
    %v597 = vadd.f32 %v540, %v591
    %v598 = vxor.u32 %v594, 2147483648
    %v599 = vmul.f32 %v598, 1.442695
    %v600 = vpow.pop %v599
    %v601 = vadd.f32 %v600, 1.0
    %v602 = vrcp.pop %v601
    %v603 = vmul.f32 %v601, %v602
    %v604 = vsub.f32 1.0, %v603
    %v605 = vmul.f32 %v602, %v604
    %v606 = vadd.f32 %v602, %v605
    %vm607 = vweird.f32 %v601
    %vm608 = vweird.f32 %v602
    %vm609 = vmor %vm607, %vm608
    %v610 = vsel %vm609, %v602, %v606
    %v611 = vand.u32 2147483647, %v601
    %vm612 = vcmp.eq.f32.partialorder %v611, 8.507059e+37
    %v613 = vand.u32 %v601, 2147483648
    %v614 = vor.u32 1.1754944e-38, %v613
    %v615 = vsel %vm612, %v614, %v610
    %v616 = vmul.f32 1.0, %v615
    %v617 = vxor.u32 %v595, 2147483648
    %v618 = vmul.f32 %v617, 1.442695
    %v619 = vpow.pop %v618
    %v620 = vadd.f32 %v619, 1.0
    %v621 = vrcp.pop %v620
    %v622 = vmul.f32 %v620, %v621
    %v623 = vsub.f32 1.0, %v622
    %v624 = vmul.f32 %v621, %v623
    %v625 = vadd.f32 %v621, %v624
    %vm626 = vweird.f32 %v620
    %vm627 = vweird.f32 %v621
    %vm628 = vmor %vm626, %vm627
    %v629 = vsel %vm628, %v621, %v625
    %v630 = vand.u32 2147483647, %v620
    %vm631 = vcmp.eq.f32.partialorder %v630, 8.507059e+37
    %v632 = vand.u32 %v620, 2147483648
    %v633 = vor.u32 1.1754944e-38, %v632
    %v634 = vsel %vm631, %v633, %v629
    %v635 = vmul.f32 1.0, %v634
    %v636 = vtanh.pop %v596
    %v637 = vxor.u32 %v597, 2147483648
    %v638 = vmul.f32 %v637, 1.442695
    %v639 = vpow.pop %v638
    %v640 = vadd.f32 %v639, 1.0
    %v641 = vrcp.pop %v640
    %v642 = vmul.f32 %v640, %v641
    %v643 = vsub.f32 1.0, %v642
    %v644 = vmul.f32 %v641, %v643
    %v645 = vadd.f32 %v641, %v644
    %vm646 = vweird.f32 %v640
    %vm647 = vweird.f32 %v641
    %vm648 = vmor %vm646, %vm647
    %v649 = vsel %vm648, %v641, %v645
    %v650 = vand.u32 2147483647, %v640
    %vm651 = vcmp.eq.f32.partialorder %v650, 8.507059e+37
    %v652 = vand.u32 %v640, 2147483648
    %v653 = vor.u32 1.1754944e-38, %v652
    %v654 = vsel %vm651, %v653, %v649
    %v655 = vmul.f32 1.0, %v654
    %v656 = vmul.f32 %v635, %v533
    %v657 = vmul.f32 %v616, %v636
    %v658 = vadd.f32 %v656, %v657
    %v659 = vtanh.pop %v658
    %v660 = vmul.f32 %v655, %v659
    %s661 = scalar_lea.vmem [#allocation4], 96
    %v662 = vld [vmem:[%s661] sm:$0xff]
    %v663 = vld [vmem:[%s661 + $0x8] sm:$0xff]
    %v664 = vld [vmem:[%s661 + $0x10] sm:$0xff]
    %v665 = vld [vmem:[%s661 + $0x18] sm:$0xff]
    %v666 = vpack.c.bf16 %v660, %v660
    %667 = vmatpush.bf16.msra.mxu0 %v256
    %668 = vmatpush.bf16.msra.mxu0 %v252
    %669 = vmatpush.bf16.msra.mxu0 %v248
    %670 = vmatpush.bf16.msra.mxu0 %v244
    %671 = vmatpush.bf16.msra.mxu0 %v240
    %672 = vmatpush.bf16.msra.mxu0 %v236
    %673 = vmatpush.bf16.msra.mxu0 %v232
    %674 = vmatpush.bf16.msra.mxu0 %v228
    %675 = vmatmul.bf16.gmra.mxu0 %v666
    %v676 = vpop.f32.mrf.mxu0
    %v677 = vadd.f32 0.0, %v676
    %v678 = vpop.f32.mrf.mxu0
    %679 = vdwg.mxu0
    %680 = vmatpush.bf16.msra.mxu0 %v257
    %681 = vmatpush.bf16.msra.mxu0 %v253
    %682 = vmatpush.bf16.msra.mxu0 %v249
    %683 = vmatpush.bf16.msra.mxu0 %v245
    %684 = vmatpush.bf16.msra.mxu0 %v241
    %685 = vmatpush.bf16.msra.mxu0 %v237
    %686 = vmatpush.bf16.msra.mxu0 %v233
    %687 = vmatpush.bf16.msra.mxu0 %v229
    %688 = vmatmul.bf16.gmra.mxu0 %v666
    %v689 = vpop.f32.mrf.mxu0
    %v690 = vadd.f32 0.0, %v689
    %v691 = vpop.f32.mrf.mxu0
    %692 = vdwg.mxu0
    %693 = vmatpush.bf16.msra.mxu0 %v258
    %694 = vmatpush.bf16.msra.mxu0 %v254
    %695 = vmatpush.bf16.msra.mxu0 %v250
    %696 = vmatpush.bf16.msra.mxu0 %v246
    %697 = vmatpush.bf16.msra.mxu0 %v242
    %698 = vmatpush.bf16.msra.mxu0 %v238
    %699 = vmatpush.bf16.msra.mxu0 %v234
    %700 = vmatpush.bf16.msra.mxu0 %v230
    %701 = vmatmul.bf16.gmra.mxu0 %v666
    %v702 = vpop.f32.mrf.mxu0
    %v703 = vadd.f32 0.0, %v702
    %v704 = vpop.f32.mrf.mxu0
    %705 = vdwg.mxu0
    %706 = vmatpush.bf16.msra.mxu0 %v259
    %707 = vmatpush.bf16.msra.mxu0 %v255
    %708 = vmatpush.bf16.msra.mxu0 %v251
    %709 = vmatpush.bf16.msra.mxu0 %v247
    %710 = vmatpush.bf16.msra.mxu0 %v243
    %711 = vmatpush.bf16.msra.mxu0 %v239
    %712 = vmatpush.bf16.msra.mxu0 %v235
    %713 = vmatpush.bf16.msra.mxu0 %v231
    %714 = vmatmul.bf16.gmra.mxu0 %v666
    %v715 = vpop.f32.mrf.mxu0
    %v716 = vadd.f32 0.0, %v715
    %v717 = vpop.f32.mrf.mxu0
    %718 = vdwg.mxu0
    %v719 = vadd.f32 %v662, %v677
    %v720 = vadd.f32 %v663, %v690
    %v721 = vadd.f32 %v664, %v703
    %v722 = vadd.f32 %v665, %v716
    %v723 = vxor.u32 %v719, 2147483648
    %v724 = vmul.f32 %v723, 1.442695
    %v725 = vpow.pop %v724
    %v726 = vadd.f32 %v725, 1.0
    %v727 = vrcp.pop %v726
    %v728 = vmul.f32 %v726, %v727
    %v729 = vsub.f32 1.0, %v728
    %v730 = vmul.f32 %v727, %v729
    %v731 = vadd.f32 %v727, %v730
    %vm732 = vweird.f32 %v726
    %vm733 = vweird.f32 %v727
    %vm734 = vmor %vm732, %vm733
    %v735 = vsel %vm734, %v727, %v731
    %v736 = vand.u32 2147483647, %v726
    %vm737 = vcmp.eq.f32.partialorder %v736, 8.507059e+37
    %v738 = vand.u32 %v726, 2147483648
    %v739 = vor.u32 1.1754944e-38, %v738
    %v740 = vsel %vm737, %v739, %v735
    %v741 = vmul.f32 1.0, %v740
    %v742 = vxor.u32 %v720, 2147483648
    %v743 = vmul.f32 %v742, 1.442695
    %v744 = vpow.pop %v743
    %v745 = vadd.f32 %v744, 1.0
    %v746 = vrcp.pop %v745
    %v747 = vmul.f32 %v745, %v746
    %v748 = vsub.f32 1.0, %v747
    %v749 = vmul.f32 %v746, %v748
    %v750 = vadd.f32 %v746, %v749
    %vm751 = vweird.f32 %v745
    %vm752 = vweird.f32 %v746
    %vm753 = vmor %vm751, %vm752
    %v754 = vsel %vm753, %v746, %v750
    %v755 = vand.u32 2147483647, %v745
    %vm756 = vcmp.eq.f32.partialorder %v755, 8.507059e+37
    %v757 = vand.u32 %v745, 2147483648
    %v758 = vor.u32 1.1754944e-38, %v757
    %v759 = vsel %vm756, %v758, %v754
    %v760 = vmul.f32 1.0, %v759
    %v761 = vtanh.pop %v721
    %v762 = vxor.u32 %v722, 2147483648
    %v763 = vmul.f32 %v762, 1.442695
    %v764 = vpow.pop %v763
    %v765 = vadd.f32 %v764, 1.0
    %v766 = vrcp.pop %v765
    %v767 = vmul.f32 %v765, %v766
    %v768 = vsub.f32 1.0, %v767
    %v769 = vmul.f32 %v766, %v768
    %v770 = vadd.f32 %v766, %v769
    %vm771 = vweird.f32 %v765
    %vm772 = vweird.f32 %v766
    %vm773 = vmor %vm771, %vm772
    %v774 = vsel %vm773, %v766, %v770
    %v775 = vand.u32 2147483647, %v765
    %vm776 = vcmp.eq.f32.partialorder %v775, 8.507059e+37
    %v777 = vand.u32 %v765, 2147483648
    %v778 = vor.u32 1.1754944e-38, %v777
    %v779 = vsel %vm776, %v778, %v774
    %v780 = vmul.f32 1.0, %v779
    %v781 = vmul.f32 %v760, %v658
    %v782 = vmul.f32 %v741, %v761
    %v783 = vadd.f32 %v781, %v782
    %v784 = vtanh.pop %v783
    %v785 = vmul.f32 %v780, %v784
    %s786 = scalar_lea.vmem [#allocation4], 128
    %v787 = vld [vmem:[%s786] sm:$0xff]
    %v788 = vld [vmem:[%s786 + $0x8] sm:$0xff]
    %v789 = vld [vmem:[%s786 + $0x10] sm:$0xff]
    %v790 = vld [vmem:[%s786 + $0x18] sm:$0xff]
    %v791 = vpack.c.bf16 %v785, %v785
    %792 = vmatpush.bf16.msra.mxu0 %v256
    %793 = vmatpush.bf16.msra.mxu0 %v252
    %794 = vmatpush.bf16.msra.mxu0 %v248
    %795 = vmatpush.bf16.msra.mxu0 %v244
    %796 = vmatpush.bf16.msra.mxu0 %v240
    %797 = vmatpush.bf16.msra.mxu0 %v236
    %798 = vmatpush.bf16.msra.mxu0 %v232
    %799 = vmatpush.bf16.msra.mxu0 %v228
    %800 = vmatmul.bf16.gmra.mxu0 %v791
    %v801 = vpop.f32.mrf.mxu0
    %v802 = vadd.f32 0.0, %v801
    %v803 = vpop.f32.mrf.mxu0
    %804 = vdwg.mxu0
    %805 = vmatpush.bf16.msra.mxu0 %v257
    %806 = vmatpush.bf16.msra.mxu0 %v253
    %807 = vmatpush.bf16.msra.mxu0 %v249
    %808 = vmatpush.bf16.msra.mxu0 %v245
    %809 = vmatpush.bf16.msra.mxu0 %v241
    %810 = vmatpush.bf16.msra.mxu0 %v237
    %811 = vmatpush.bf16.msra.mxu0 %v233
    %812 = vmatpush.bf16.msra.mxu0 %v229
    %813 = vmatmul.bf16.gmra.mxu0 %v791
    %v814 = vpop.f32.mrf.mxu0
    %v815 = vadd.f32 0.0, %v814
    %v816 = vpop.f32.mrf.mxu0
    %817 = vdwg.mxu0
    %818 = vmatpush.bf16.msra.mxu0 %v258
    %819 = vmatpush.bf16.msra.mxu0 %v254
    %820 = vmatpush.bf16.msra.mxu0 %v250
    %821 = vmatpush.bf16.msra.mxu0 %v246
    %822 = vmatpush.bf16.msra.mxu0 %v242
    %823 = vmatpush.bf16.msra.mxu0 %v238
    %824 = vmatpush.bf16.msra.mxu0 %v234
    %825 = vmatpush.bf16.msra.mxu0 %v230
    %826 = vmatmul.bf16.gmra.mxu0 %v791
    %v827 = vpop.f32.mrf.mxu0
    %v828 = vadd.f32 0.0, %v827
    %v829 = vpop.f32.mrf.mxu0
    %830 = vdwg.mxu0
    %831 = vmatpush.bf16.msra.mxu0 %v259
    %832 = vmatpush.bf16.msra.mxu0 %v255
    %833 = vmatpush.bf16.msra.mxu0 %v251
    %834 = vmatpush.bf16.msra.mxu0 %v247
    %835 = vmatpush.bf16.msra.mxu0 %v243
    %836 = vmatpush.bf16.msra.mxu0 %v239
    %837 = vmatpush.bf16.msra.mxu0 %v235
    %838 = vmatpush.bf16.msra.mxu0 %v231
    %839 = vmatmul.bf16.gmra.mxu0 %v791
    %v840 = vpop.f32.mrf.mxu0
    %v841 = vadd.f32 0.0, %v840
    %v842 = vpop.f32.mrf.mxu0
    %843 = vdwg.mxu0
    %v844 = vadd.f32 %v787, %v802
    %v845 = vadd.f32 %v788, %v815
    %v846 = vadd.f32 %v789, %v828
    %v847 = vadd.f32 %v790, %v841
    %v848 = vxor.u32 %v844, 2147483648
    %v849 = vmul.f32 %v848, 1.442695
    %v850 = vpow.pop %v849
    %v851 = vadd.f32 %v850, 1.0
    %v852 = vrcp.pop %v851
    %v853 = vmul.f32 %v851, %v852
    %v854 = vsub.f32 1.0, %v853
    %v855 = vmul.f32 %v852, %v854
    %v856 = vadd.f32 %v852, %v855
    %vm857 = vweird.f32 %v851
    %vm858 = vweird.f32 %v852
    %vm859 = vmor %vm857, %vm858
    %v860 = vsel %vm859, %v852, %v856
    %v861 = vand.u32 2147483647, %v851
    %vm862 = vcmp.eq.f32.partialorder %v861, 8.507059e+37
    %v863 = vand.u32 %v851, 2147483648
    %v864 = vor.u32 1.1754944e-38, %v863
    %v865 = vsel %vm862, %v864, %v860
    %v866 = vmul.f32 1.0, %v865
    %v867 = vxor.u32 %v845, 2147483648
    %v868 = vmul.f32 %v867, 1.442695
    %v869 = vpow.pop %v868
    %v870 = vadd.f32 %v869, 1.0
    %v871 = vrcp.pop %v870
    %v872 = vmul.f32 %v870, %v871
    %v873 = vsub.f32 1.0, %v872
    %v874 = vmul.f32 %v871, %v873
    %v875 = vadd.f32 %v871, %v874
    %vm876 = vweird.f32 %v870
    %vm877 = vweird.f32 %v871
    %vm878 = vmor %vm876, %vm877
    %v879 = vsel %vm878, %v871, %v875
    %v880 = vand.u32 2147483647, %v870
    %vm881 = vcmp.eq.f32.partialorder %v880, 8.507059e+37
    %v882 = vand.u32 %v870, 2147483648
    %v883 = vor.u32 1.1754944e-38, %v882
    %v884 = vsel %vm881, %v883, %v879
    %v885 = vmul.f32 1.0, %v884
    %v886 = vtanh.pop %v846
    %v887 = vxor.u32 %v847, 2147483648
    %v888 = vmul.f32 %v887, 1.442695
    %v889 = vpow.pop %v888
    %v890 = vadd.f32 %v889, 1.0
    %v891 = vrcp.pop %v890
    %v892 = vmul.f32 %v890, %v891
    %v893 = vsub.f32 1.0, %v892
    %v894 = vmul.f32 %v891, %v893
    %v895 = vadd.f32 %v891, %v894
    %vm896 = vweird.f32 %v890
    %vm897 = vweird.f32 %v891
    %vm898 = vmor %vm896, %vm897
    %v899 = vsel %vm898, %v891, %v895
    %v900 = vand.u32 2147483647, %v890
    %vm901 = vcmp.eq.f32.partialorder %v900, 8.507059e+37
    %v902 = vand.u32 %v890, 2147483648
    %v903 = vor.u32 1.1754944e-38, %v902
    %v904 = vsel %vm901, %v903, %v899
    %v905 = vmul.f32 1.0, %v904
    %v906 = vmul.f32 %v885, %v783
    %v907 = vmul.f32 %v866, %v886
    %v908 = vadd.f32 %v906, %v907
    %v909 = vtanh.pop %v908
    %v910 = vmul.f32 %v905, %v909
    %s911 = scalar_lea.vmem [#allocation4], 160
    %v912 = vld [vmem:[%s911] sm:$0xff]
    %v913 = vld [vmem:[%s911 + $0x8] sm:$0xff]
    %v914 = vld [vmem:[%s911 + $0x10] sm:$0xff]
    %v915 = vld [vmem:[%s911 + $0x18] sm:$0xff]
    %v916 = vpack.c.bf16 %v910, %v910
    %917 = vmatpush.bf16.msra.mxu0 %v256
    %918 = vmatpush.bf16.msra.mxu0 %v252
    %919 = vmatpush.bf16.msra.mxu0 %v248
    %920 = vmatpush.bf16.msra.mxu0 %v244
    %921 = vmatpush.bf16.msra.mxu0 %v240
    %922 = vmatpush.bf16.msra.mxu0 %v236
    %923 = vmatpush.bf16.msra.mxu0 %v232
    %924 = vmatpush.bf16.msra.mxu0 %v228
    %925 = vmatmul.bf16.gmra.mxu0 %v916
    %v926 = vpop.f32.mrf.mxu0
    %v927 = vadd.f32 0.0, %v926
    %v928 = vpop.f32.mrf.mxu0
    %929 = vdwg.mxu0
    %930 = vmatpush.bf16.msra.mxu0 %v257
    %931 = vmatpush.bf16.msra.mxu0 %v253
    %932 = vmatpush.bf16.msra.mxu0 %v249
    %933 = vmatpush.bf16.msra.mxu0 %v245
    %934 = vmatpush.bf16.msra.mxu0 %v241
    %935 = vmatpush.bf16.msra.mxu0 %v237
    %936 = vmatpush.bf16.msra.mxu0 %v233
    %937 = vmatpush.bf16.msra.mxu0 %v229
    %938 = vmatmul.bf16.gmra.mxu0 %v916
    %v939 = vpop.f32.mrf.mxu0
    %v940 = vadd.f32 0.0, %v939
    %v941 = vpop.f32.mrf.mxu0
    %942 = vdwg.mxu0
    %943 = vmatpush.bf16.msra.mxu0 %v258
    %944 = vmatpush.bf16.msra.mxu0 %v254
    %945 = vmatpush.bf16.msra.mxu0 %v250
    %946 = vmatpush.bf16.msra.mxu0 %v246
    %947 = vmatpush.bf16.msra.mxu0 %v242
    %948 = vmatpush.bf16.msra.mxu0 %v238
    %949 = vmatpush.bf16.msra.mxu0 %v234
    %950 = vmatpush.bf16.msra.mxu0 %v230
    %951 = vmatmul.bf16.gmra.mxu0 %v916
    %v952 = vpop.f32.mrf.mxu0
    %v953 = vadd.f32 0.0, %v952
    %v954 = vpop.f32.mrf.mxu0
    %955 = vdwg.mxu0
    %956 = vmatpush.bf16.msra.mxu0 %v259
    %957 = vmatpush.bf16.msra.mxu0 %v255
    %958 = vmatpush.bf16.msra.mxu0 %v251
    %959 = vmatpush.bf16.msra.mxu0 %v247
    %960 = vmatpush.bf16.msra.mxu0 %v243
    %961 = vmatpush.bf16.msra.mxu0 %v239
    %962 = vmatpush.bf16.msra.mxu0 %v235
    %963 = vmatpush.bf16.msra.mxu0 %v231
    %964 = vmatmul.bf16.gmra.mxu0 %v916
    %v965 = vpop.f32.mrf.mxu0
    %v966 = vadd.f32 0.0, %v965
    %v967 = vpop.f32.mrf.mxu0
    %968 = vdwg.mxu0
    %v969 = vadd.f32 %v912, %v927
    %v970 = vadd.f32 %v913, %v940
    %v971 = vadd.f32 %v914, %v953
    %v972 = vadd.f32 %v915, %v966
    %v973 = vxor.u32 %v969, 2147483648
    %v974 = vmul.f32 %v973, 1.442695
    %v975 = vpow.pop %v974
    %v976 = vadd.f32 %v975, 1.0
    %v977 = vrcp.pop %v976
    %v978 = vmul.f32 %v976, %v977
    %v979 = vsub.f32 1.0, %v978
    %v980 = vmul.f32 %v977, %v979
    %v981 = vadd.f32 %v977, %v980
    %vm982 = vweird.f32 %v976
    %vm983 = vweird.f32 %v977
    %vm984 = vmor %vm982, %vm983
    %v985 = vsel %vm984, %v977, %v981
    %v986 = vand.u32 2147483647, %v976
    %vm987 = vcmp.eq.f32.partialorder %v986, 8.507059e+37
    %v988 = vand.u32 %v976, 2147483648
    %v989 = vor.u32 1.1754944e-38, %v988
    %v990 = vsel %vm987, %v989, %v985
    %v991 = vmul.f32 1.0, %v990
    %v992 = vxor.u32 %v970, 2147483648
    %v993 = vmul.f32 %v992, 1.442695
    %v994 = vpow.pop %v993
    %v995 = vadd.f32 %v994, 1.0
    %v996 = vrcp.pop %v995
    %v997 = vmul.f32 %v995, %v996
    %v998 = vsub.f32 1.0, %v997
    %v999 = vmul.f32 %v996, %v998
    %v1000 = vadd.f32 %v996, %v999
    %vm1001 = vweird.f32 %v995
    %vm1002 = vweird.f32 %v996
    %vm1003 = vmor %vm1001, %vm1002
    %v1004 = vsel %vm1003, %v996, %v1000
    %v1005 = vand.u32 2147483647, %v995
    %vm1006 = vcmp.eq.f32.partialorder %v1005, 8.507059e+37
    %v1007 = vand.u32 %v995, 2147483648
    %v1008 = vor.u32 1.1754944e-38, %v1007
    %v1009 = vsel %vm1006, %v1008, %v1004
    %v1010 = vmul.f32 1.0, %v1009
    %v1011 = vtanh.pop %v971
    %v1012 = vxor.u32 %v972, 2147483648
    %v1013 = vmul.f32 %v1012, 1.442695
    %v1014 = vpow.pop %v1013
    %v1015 = vadd.f32 %v1014, 1.0
    %v1016 = vrcp.pop %v1015
    %v1017 = vmul.f32 %v1015, %v1016
    %v1018 = vsub.f32 1.0, %v1017
    %v1019 = vmul.f32 %v1016, %v1018
    %v1020 = vadd.f32 %v1016, %v1019
    %vm1021 = vweird.f32 %v1015
    %vm1022 = vweird.f32 %v1016
    %vm1023 = vmor %vm1021, %vm1022
    %v1024 = vsel %vm1023, %v1016, %v1020
    %v1025 = vand.u32 2147483647, %v1015
    %vm1026 = vcmp.eq.f32.partialorder %v1025, 8.507059e+37
    %v1027 = vand.u32 %v1015, 2147483648
    %v1028 = vor.u32 1.1754944e-38, %v1027
    %v1029 = vsel %vm1026, %v1028, %v1024
    %v1030 = vmul.f32 1.0, %v1029
    %v1031 = vmul.f32 %v1010, %v908
    %v1032 = vmul.f32 %v991, %v1011
    %v1033 = vadd.f32 %v1031, %v1032
    %v1034 = vtanh.pop %v1033
    %v1035 = vmul.f32 %v1030, %v1034
    %s1036 = scalar_lea.vmem [#allocation4], 192
    %v1037 = vld [vmem:[%s1036] sm:$0xff]
    %v1038 = vld [vmem:[%s1036 + $0x8] sm:$0xff]
    %v1039 = vld [vmem:[%s1036 + $0x10] sm:$0xff]
    %v1040 = vld [vmem:[%s1036 + $0x18] sm:$0xff]
    %v1041 = vpack.c.bf16 %v1035, %v1035
    %1042 = vmatpush.bf16.msra.mxu0 %v256
    %1043 = vmatpush.bf16.msra.mxu0 %v252
    %1044 = vmatpush.bf16.msra.mxu0 %v248
    %1045 = vmatpush.bf16.msra.mxu0 %v244
    %1046 = vmatpush.bf16.msra.mxu0 %v240
    %1047 = vmatpush.bf16.msra.mxu0 %v236
    %1048 = vmatpush.bf16.msra.mxu0 %v232
    %1049 = vmatpush.bf16.msra.mxu0 %v228
    %1050 = vmatmul.bf16.gmra.mxu0 %v1041
    %v1051 = vpop.f32.mrf.mxu0
    %v1052 = vadd.f32 0.0, %v1051
    %v1053 = vpop.f32.mrf.mxu0
    %1054 = vdwg.mxu0
    %1055 = vmatpush.bf16.msra.mxu0 %v257
    %1056 = vmatpush.bf16.msra.mxu0 %v253
    %1057 = vmatpush.bf16.msra.mxu0 %v249
    %1058 = vmatpush.bf16.msra.mxu0 %v245
    %1059 = vmatpush.bf16.msra.mxu0 %v241
    %1060 = vmatpush.bf16.msra.mxu0 %v237
    %1061 = vmatpush.bf16.msra.mxu0 %v233
    %1062 = vmatpush.bf16.msra.mxu0 %v229
    %1063 = vmatmul.bf16.gmra.mxu0 %v1041
    %v1064 = vpop.f32.mrf.mxu0
    %v1065 = vadd.f32 0.0, %v1064
    %v1066 = vpop.f32.mrf.mxu0
    %1067 = vdwg.mxu0
    %1068 = vmatpush.bf16.msra.mxu0 %v258
    %1069 = vmatpush.bf16.msra.mxu0 %v254
    %1070 = vmatpush.bf16.msra.mxu0 %v250
    %1071 = vmatpush.bf16.msra.mxu0 %v246
    %1072 = vmatpush.bf16.msra.mxu0 %v242
    %1073 = vmatpush.bf16.msra.mxu0 %v238
    %1074 = vmatpush.bf16.msra.mxu0 %v234
    %1075 = vmatpush.bf16.msra.mxu0 %v230
    %1076 = vmatmul.bf16.gmra.mxu0 %v1041
    %v1077 = vpop.f32.mrf.mxu0
    %v1078 = vadd.f32 0.0, %v1077
    %v1079 = vpop.f32.mrf.mxu0
    %1080 = vdwg.mxu0
    %1081 = vmatpush.bf16.msra.mxu0 %v259
    %1082 = vmatpush.bf16.msra.mxu0 %v255
    %1083 = vmatpush.bf16.msra.mxu0 %v251
    %1084 = vmatpush.bf16.msra.mxu0 %v247
    %1085 = vmatpush.bf16.msra.mxu0 %v243
    %1086 = vmatpush.bf16.msra.mxu0 %v239
    %1087 = vmatpush.bf16.msra.mxu0 %v235
    %1088 = vmatpush.bf16.msra.mxu0 %v231
    %1089 = vmatmul.bf16.gmra.mxu0 %v1041
    %v1090 = vpop.f32.mrf.mxu0
    %v1091 = vadd.f32 0.0, %v1090
    %v1092 = vpop.f32.mrf.mxu0
    %1093 = vdwg.mxu0
    %v1094 = vadd.f32 %v1037, %v1052
    %v1095 = vadd.f32 %v1038, %v1065
    %v1096 = vadd.f32 %v1039, %v1078
    %v1097 = vadd.f32 %v1040, %v1091
    %v1098 = vxor.u32 %v1094, 2147483648
    %v1099 = vmul.f32 %v1098, 1.442695
    %v1100 = vpow.pop %v1099
    %v1101 = vadd.f32 %v1100, 1.0
    %v1102 = vrcp.pop %v1101
    %v1103 = vmul.f32 %v1101, %v1102
    %v1104 = vsub.f32 1.0, %v1103
    %v1105 = vmul.f32 %v1102, %v1104
    %v1106 = vadd.f32 %v1102, %v1105
    %vm1107 = vweird.f32 %v1101
    %vm1108 = vweird.f32 %v1102
    %vm1109 = vmor %vm1107, %vm1108
    %v1110 = vsel %vm1109, %v1102, %v1106
    %v1111 = vand.u32 2147483647, %v1101
    %vm1112 = vcmp.eq.f32.partialorder %v1111, 8.507059e+37
    %v1113 = vand.u32 %v1101, 2147483648
    %v1114 = vor.u32 1.1754944e-38, %v1113
    %v1115 = vsel %vm1112, %v1114, %v1110
    %v1116 = vmul.f32 1.0, %v1115
    %v1117 = vxor.u32 %v1095, 2147483648
    %v1118 = vmul.f32 %v1117, 1.442695
    %v1119 = vpow.pop %v1118
    %v1120 = vadd.f32 %v1119, 1.0
    %v1121 = vrcp.pop %v1120
    %v1122 = vmul.f32 %v1120, %v1121
    %v1123 = vsub.f32 1.0, %v1122
    %v1124 = vmul.f32 %v1121, %v1123
    %v1125 = vadd.f32 %v1121, %v1124
    %vm1126 = vweird.f32 %v1120
    %vm1127 = vweird.f32 %v1121
    %vm1128 = vmor %vm1126, %vm1127
    %v1129 = vsel %vm1128, %v1121, %v1125
    %v1130 = vand.u32 2147483647, %v1120
    %vm1131 = vcmp.eq.f32.partialorder %v1130, 8.507059e+37
    %v1132 = vand.u32 %v1120, 2147483648
    %v1133 = vor.u32 1.1754944e-38, %v1132
    %v1134 = vsel %vm1131, %v1133, %v1129
    %v1135 = vmul.f32 1.0, %v1134
    %v1136 = vtanh.pop %v1096
    %v1137 = vxor.u32 %v1097, 2147483648
    %v1138 = vmul.f32 %v1137, 1.442695
    %v1139 = vpow.pop %v1138
    %v1140 = vadd.f32 %v1139, 1.0
    %v1141 = vrcp.pop %v1140
    %v1142 = vmul.f32 %v1140, %v1141
    %v1143 = vsub.f32 1.0, %v1142
    %v1144 = vmul.f32 %v1141, %v1143
    %v1145 = vadd.f32 %v1141, %v1144
    %vm1146 = vweird.f32 %v1140
    %vm1147 = vweird.f32 %v1141
    %vm1148 = vmor %vm1146, %vm1147
    %v1149 = vsel %vm1148, %v1141, %v1145
    %v1150 = vand.u32 2147483647, %v1140
    %vm1151 = vcmp.eq.f32.partialorder %v1150, 8.507059e+37
    %v1152 = vand.u32 %v1140, 2147483648
    %v1153 = vor.u32 1.1754944e-38, %v1152
    %v1154 = vsel %vm1151, %v1153, %v1149
    %v1155 = vmul.f32 1.0, %v1154
    %v1156 = vmul.f32 %v1135, %v1033
    %v1157 = vmul.f32 %v1116, %v1136
    %v1158 = vadd.f32 %v1156, %v1157
    %v1159 = vtanh.pop %v1158
    %v1160 = vmul.f32 %v1155, %v1159
    %s1161 = scalar_lea.vmem [#allocation4], 224
    %v1162 = vld [vmem:[%s1161] sm:$0xff]
    %v1163 = vld [vmem:[%s1161 + $0x8] sm:$0xff]
    %v1164 = vld [vmem:[%s1161 + $0x10] sm:$0xff]
    %v1165 = vld [vmem:[%s1161 + $0x18] sm:$0xff]
    %v1166 = vpack.c.bf16 %v1160, %v1160
    %1167 = vmatpush.bf16.msra.mxu0 %v256
    %1168 = vmatpush.bf16.msra.mxu0 %v252
    %1169 = vmatpush.bf16.msra.mxu0 %v248
    %1170 = vmatpush.bf16.msra.mxu0 %v244
    %1171 = vmatpush.bf16.msra.mxu0 %v240
    %1172 = vmatpush.bf16.msra.mxu0 %v236
    %1173 = vmatpush.bf16.msra.mxu0 %v232
    %1174 = vmatpush.bf16.msra.mxu0 %v228
    %1175 = vmatmul.bf16.gmra.mxu0 %v1166
    %v1176 = vpop.f32.mrf.mxu0
    %v1177 = vadd.f32 0.0, %v1176
    %v1178 = vpop.f32.mrf.mxu0
    %1179 = vdwg.mxu0
    %1180 = vmatpush.bf16.msra.mxu0 %v257
    %1181 = vmatpush.bf16.msra.mxu0 %v253
    %1182 = vmatpush.bf16.msra.mxu0 %v249
    %1183 = vmatpush.bf16.msra.mxu0 %v245
    %1184 = vmatpush.bf16.msra.mxu0 %v241
    %1185 = vmatpush.bf16.msra.mxu0 %v237
    %1186 = vmatpush.bf16.msra.mxu0 %v233
    %1187 = vmatpush.bf16.msra.mxu0 %v229
    %1188 = vmatmul.bf16.gmra.mxu0 %v1166
    %v1189 = vpop.f32.mrf.mxu0
    %v1190 = vadd.f32 0.0, %v1189
    %v1191 = vpop.f32.mrf.mxu0
    %1192 = vdwg.mxu0
    %1193 = vmatpush.bf16.msra.mxu0 %v258
    %1194 = vmatpush.bf16.msra.mxu0 %v254
    %1195 = vmatpush.bf16.msra.mxu0 %v250
    %1196 = vmatpush.bf16.msra.mxu0 %v246
    %1197 = vmatpush.bf16.msra.mxu0 %v242
    %1198 = vmatpush.bf16.msra.mxu0 %v238
    %1199 = vmatpush.bf16.msra.mxu0 %v234
    %1200 = vmatpush.bf16.msra.mxu0 %v230
    %1201 = vmatmul.bf16.gmra.mxu0 %v1166
    %v1202 = vpop.f32.mrf.mxu0
    %v1203 = vadd.f32 0.0, %v1202
    %v1204 = vpop.f32.mrf.mxu0
    %1205 = vdwg.mxu0
    %1206 = vmatpush.bf16.msra.mxu0 %v259
    %1207 = vmatpush.bf16.msra.mxu0 %v255
    %1208 = vmatpush.bf16.msra.mxu0 %v251
    %1209 = vmatpush.bf16.msra.mxu0 %v247
    %1210 = vmatpush.bf16.msra.mxu0 %v243
    %1211 = vmatpush.bf16.msra.mxu0 %v239
    %1212 = vmatpush.bf16.msra.mxu0 %v235
    %1213 = vmatpush.bf16.msra.mxu0 %v231
    %1214 = vmatmul.bf16.gmra.mxu0 %v1166
    %v1215 = vpop.f32.mrf.mxu0
    %v1216 = vadd.f32 0.0, %v1215
    %v1217 = vpop.f32.mrf.mxu0
    %1218 = vdwg.mxu0
    %v1219 = vadd.f32 %v1162, %v1177
    %v1220 = vadd.f32 %v1163, %v1190
    %v1221 = vadd.f32 %v1164, %v1203
    %v1222 = vadd.f32 %v1165, %v1216
    %v1223 = vxor.u32 %v1219, 2147483648
    %v1224 = vmul.f32 %v1223, 1.442695
    %v1225 = vpow.pop %v1224
    %v1226 = vadd.f32 %v1225, 1.0
    %v1227 = vrcp.pop %v1226
    %v1228 = vmul.f32 %v1226, %v1227
    %v1229 = vsub.f32 1.0, %v1228
    %v1230 = vmul.f32 %v1227, %v1229
    %v1231 = vadd.f32 %v1227, %v1230
    %vm1232 = vweird.f32 %v1226
    %vm1233 = vweird.f32 %v1227
    %vm1234 = vmor %vm1232, %vm1233
    %v1235 = vsel %vm1234, %v1227, %v1231
    %v1236 = vand.u32 2147483647, %v1226
    %vm1237 = vcmp.eq.f32.partialorder %v1236, 8.507059e+37
    %v1238 = vand.u32 %v1226, 2147483648
    %v1239 = vor.u32 1.1754944e-38, %v1238
    %v1240 = vsel %vm1237, %v1239, %v1235
    %v1241 = vmul.f32 1.0, %v1240
    %v1242 = vxor.u32 %v1220, 2147483648
    %v1243 = vmul.f32 %v1242, 1.442695
    %v1244 = vpow.pop %v1243
    %v1245 = vadd.f32 %v1244, 1.0
    %v1246 = vrcp.pop %v1245
    %v1247 = vmul.f32 %v1245, %v1246
    %v1248 = vsub.f32 1.0, %v1247
    %v1249 = vmul.f32 %v1246, %v1248
    %v1250 = vadd.f32 %v1246, %v1249
    %vm1251 = vweird.f32 %v1245
    %vm1252 = vweird.f32 %v1246
    %vm1253 = vmor %vm1251, %vm1252
    %v1254 = vsel %vm1253, %v1246, %v1250
    %v1255 = vand.u32 2147483647, %v1245
    %vm1256 = vcmp.eq.f32.partialorder %v1255, 8.507059e+37
    %v1257 = vand.u32 %v1245, 2147483648
    %v1258 = vor.u32 1.1754944e-38, %v1257
    %v1259 = vsel %vm1256, %v1258, %v1254
    %v1260 = vmul.f32 1.0, %v1259
    %v1261 = vtanh.pop %v1221
    %v1262 = vxor.u32 %v1222, 2147483648
    %v1263 = vmul.f32 %v1262, 1.442695
    %v1264 = vpow.pop %v1263
    %v1265 = vadd.f32 %v1264, 1.0
    %v1266 = vrcp.pop %v1265
    %v1267 = vmul.f32 %v1265, %v1266
    %v1268 = vsub.f32 1.0, %v1267
    %v1269 = vmul.f32 %v1266, %v1268
    %v1270 = vadd.f32 %v1266, %v1269
    %vm1271 = vweird.f32 %v1265
    %vm1272 = vweird.f32 %v1266
    %vm1273 = vmor %vm1271, %vm1272
    %v1274 = vsel %vm1273, %v1266, %v1270
    %v1275 = vand.u32 2147483647, %v1265
    %vm1276 = vcmp.eq.f32.partialorder %v1275, 8.507059e+37
    %v1277 = vand.u32 %v1265, 2147483648
    %v1278 = vor.u32 1.1754944e-38, %v1277
    %v1279 = vsel %vm1276, %v1278, %v1274
    %v1280 = vmul.f32 1.0, %v1279
    %v1281 = vmul.f32 %v1260, %v1158
    %v1282 = vmul.f32 %v1241, %v1261
    %v1283 = vadd.f32 %v1281, %v1282
    %v1284 = vtanh.pop %v1283
    %v1285 = vmul.f32 %v1280, %v1284
    %1286 = vst [vmem:[#allocation2] sm:$0xff] %v1285
    %1287 = vst [vmem:[#allocation3] sm:$0xff] %v1283
    // Predicated region
    $region46: #{tpu_custom_call.1} parent=1 // pred_check
      %p1288 = pneg %p87
    $region47: #{tpu_custom_call.1} parent=1 // pred_check_branch
      %1290 = sbr.rel (%p1288) target = $region49
    $region48: #{tpu_custom_call.1} parent=1 // pred_region
      %v1291 = vpack.c.bf16 %v1285, %v1285
      %v1292 = vld [vmem:[#allocation9] sm:$0xff]
      %v1293 = vld [vmem:[#allocation9 + $0x8] sm:$0xff]
      %v1294 = vld [vmem:[#allocation9 + $0x10] sm:$0xff]
      %v1295 = vld [vmem:[#allocation9 + $0x18] sm:$0xff]
      %v1296 = vld [vmem:[#allocation9 + $0x20] sm:$0xff]
      %v1297 = vld [vmem:[#allocation9 + $0x28] sm:$0xff]
      %v1298 = vld [vmem:[#allocation9 + $0x30] sm:$0xff]
      %v1299 = vld [vmem:[#allocation9 + $0x38] sm:$0xff]
      %v1300 = vld [vmem:[#allocation9 + $0x40] sm:$0xff]
      %v1301 = vld [vmem:[#allocation9 + $0x48] sm:$0xff]
      %v1302 = vld [vmem:[#allocation9 + $0x50] sm:$0xff]
      %v1303 = vld [vmem:[#allocation9 + $0x58] sm:$0xff]
      %v1304 = vld [vmem:[#allocation9 + $0x60] sm:$0xff]
      %v1305 = vld [vmem:[#allocation9 + $0x68] sm:$0xff]
      %v1306 = vld [vmem:[#allocation9 + $0x70] sm:$0xff]
      %v1307 = vld [vmem:[#allocation9 + $0x78] sm:$0xff]
      %v1308 = vld [vmem:[%s3] sm:$0x3]
      %v1310 = vperm.slane %v1308, 0
      %v1311 = vperm.slane %v1308, 1
      %v1330 = vunpack.c.l.b16 %v1292
      %v1331 = vunpack.c.h.b16 %v1292
      %v1332 = vunpack.c.l.b16 %v1293
      %v1333 = vunpack.c.h.b16 %v1293
      %v1334 = vunpack.c.l.b16 %v1294
      %v1335 = vunpack.c.h.b16 %v1294
      %v1336 = vunpack.c.l.b16 %v1295
      %v1337 = vunpack.c.h.b16 %v1295
      %v1338 = vunpack.c.l.b16 %v1296
      %v1339 = vunpack.c.h.b16 %v1296
      %v1340 = vunpack.c.l.b16 %v1297
      %v1341 = vunpack.c.h.b16 %v1297
      %v1342 = vunpack.c.l.b16 %v1298
      %v1343 = vunpack.c.h.b16 %v1298
      %v1344 = vunpack.c.l.b16 %v1299
      %v1345 = vunpack.c.h.b16 %v1299
      %v1346 = vunpack.c.l.b16 %v1300
      %v1347 = vunpack.c.h.b16 %v1300
      %v1348 = vunpack.c.l.b16 %v1301
      %v1349 = vunpack.c.h.b16 %v1301
      %v1350 = vunpack.c.l.b16 %v1302
      %v1351 = vunpack.c.h.b16 %v1302
      %v1352 = vunpack.c.l.b16 %v1303
      %v1353 = vunpack.c.h.b16 %v1303
      %v1354 = vunpack.c.l.b16 %v1304
      %v1355 = vunpack.c.h.b16 %v1304
      %v1356 = vunpack.c.l.b16 %v1305
      %v1357 = vunpack.c.h.b16 %v1305
      %v1358 = vunpack.c.l.b16 %v1306
      %v1359 = vunpack.c.h.b16 %v1306
      %v1360 = vunpack.c.l.b16 %v1307
      %v1361 = vunpack.c.h.b16 %v1307
      %v1362 = vpack.c.b16 %v1332, %v1330
      %v1363 = vpack.c.b16 %v1333, %v1331
      %v1364 = vpack.c.b16 %v1336, %v1334
      %v1365 = vpack.c.b16 %v1337, %v1335
      %v1366 = vpack.c.b16 %v1340, %v1338
      %v1367 = vpack.c.b16 %v1341, %v1339
      %v1368 = vpack.c.b16 %v1344, %v1342
      %v1369 = vpack.c.b16 %v1345, %v1343
      %v1370 = vpack.c.b16 %v1348, %v1346
      %v1371 = vpack.c.b16 %v1349, %v1347
      %v1372 = vpack.c.b16 %v1352, %v1350
      %v1373 = vpack.c.b16 %v1353, %v1351
      %v1374 = vpack.c.b16 %v1356, %v1354
      %v1375 = vpack.c.b16 %v1357, %v1355
      %v1376 = vpack.c.b16 %v1360, %v1358
      %v1377 = vpack.c.b16 %v1361, %v1359
      %1394 = vmatpush.bf16.msra.mxu0 %v1376
      %1395 = vmatpush.bf16.msra.mxu0 %v1374
      %1396 = vmatpush.bf16.msra.mxu0 %v1372
      %1397 = vmatpush.bf16.msra.mxu0 %v1370
      %1398 = vmatpush.bf16.msra.mxu0 %v1368
      %1399 = vmatpush.bf16.msra.mxu0 %v1366
      %1400 = vmatpush.bf16.msra.mxu0 %v1364
      %1401 = vmatpush.bf16.msra.mxu0 %v1362
      %1402 = vmatmul.bf16.gmra.mxu0 %v1291
      %v1403 = vpop.f32.mrf.mxu0
      %v1404 = vadd.f32 %v1310, %v1403
      %v1405 = vpop.f32.mrf.mxu0
      %1406 = vdwg.mxu0
      %1407 = vmatpush.bf16.msra.mxu0 %v1377
      %1408 = vmatpush.bf16.msra.mxu0 %v1375
      %1409 = vmatpush.bf16.msra.mxu0 %v1373
      %1410 = vmatpush.bf16.msra.mxu0 %v1371
      %1411 = vmatpush.bf16.msra.mxu0 %v1369
      %1412 = vmatpush.bf16.msra.mxu0 %v1367
      %1413 = vmatpush.bf16.msra.mxu0 %v1365
      %1414 = vmatpush.bf16.msra.mxu0 %v1363
      %1415 = vmatmul.bf16.gmra.mxu0 %v1291
      %v1416 = vpop.f32.mrf.mxu0
      %v1417 = vadd.f32 %v1311, %v1416
      %v1418 = vpop.f32.mrf.mxu0
      %1419 = vdwg.mxu0
      %v1420 = vmax.f32 %v1404, 0.0
      %v1421 = vmax.f32 %v1417, 0.0
      %v1422 = vpack.c.bf16 %v1420, %v1420
      %v1423 = vpack.c.bf16 %v1421, %v1421
      %v1424 = vld [vmem:[#allocation10] sm:$0xf]
      %v1425 = vld [vmem:[#allocation10 + $0x4] sm:$0xf]
      %v1426 = vld [vmem:[#allocation10 + $0x8] sm:$0xf]
      %v1427 = vld [vmem:[#allocation10 + $0xc] sm:$0xf]
      %v1428 = vld [vmem:[#allocation10 + $0x10] sm:$0xf]
      %v1429 = vld [vmem:[#allocation10 + $0x14] sm:$0xf]
      %v1430 = vld [vmem:[#allocation10 + $0x18] sm:$0xf]
      %v1431 = vld [vmem:[#allocation10 + $0x1c] sm:$0xf]
      %v1432 = vld [vmem:[#allocation10 + $0x20] sm:$0xf]
      %v1433 = vld [vmem:[#allocation10 + $0x24] sm:$0xf]
      %v1434 = vld [vmem:[#allocation10 + $0x28] sm:$0xf]
      %v1435 = vld [vmem:[#allocation10 + $0x2c] sm:$0xf]
      %v1436 = vld [vmem:[#allocation10 + $0x30] sm:$0xf]
      %v1437 = vld [vmem:[#allocation10 + $0x34] sm:$0xf]
      %v1438 = vld [vmem:[#allocation10 + $0x38] sm:$0xf]
      %v1439 = vld [vmem:[#allocation10 + $0x3c] sm:$0xf]
      %v1440 = vld [vmem:[#allocation10 + $0x40] sm:$0xf]
      %v1441 = vld [vmem:[#allocation10 + $0x44] sm:$0xf]
      %v1442 = vld [vmem:[#allocation10 + $0x48] sm:$0xf]
      %v1443 = vld [vmem:[#allocation10 + $0x4c] sm:$0xf]
      %v1444 = vld [vmem:[#allocation10 + $0x50] sm:$0xf]
      %v1445 = vld [vmem:[#allocation10 + $0x54] sm:$0xf]
      %v1446 = vld [vmem:[#allocation10 + $0x58] sm:$0xf]
      %v1447 = vld [vmem:[#allocation10 + $0x5c] sm:$0xf]
      %v1448 = vld [vmem:[#allocation10 + $0x60] sm:$0xf]
      %v1449 = vld [vmem:[#allocation10 + $0x64] sm:$0xf]
      %v1450 = vld [vmem:[#allocation10 + $0x68] sm:$0xf]
      %v1451 = vld [vmem:[#allocation10 + $0x6c] sm:$0xf]
      %v1452 = vld [vmem:[#allocation10 + $0x70] sm:$0xf]
      %v1453 = vld [vmem:[#allocation10 + $0x74] sm:$0xf]
      %v1454 = vld [vmem:[#allocation10 + $0x78] sm:$0xf]
      %v1455 = vld [vmem:[#allocation10 + $0x7c] sm:$0xf]
      %v1456 = vld [vmem:[%s5] sm:$0x1]
      %v1458 = vperm.slane %v1456, 0
      %v1492 = vunpack.c.l.b16 %v1424
      %v1493 = vunpack.c.l.b16 %v1425
      %v1494 = vunpack.c.l.b16 %v1426
      %v1495 = vunpack.c.l.b16 %v1427
      %v1496 = vunpack.c.l.b16 %v1428
      %v1497 = vunpack.c.l.b16 %v1429
      %v1498 = vunpack.c.l.b16 %v1430
      %v1499 = vunpack.c.l.b16 %v1431
      %v1500 = vunpack.c.l.b16 %v1432
      %v1501 = vunpack.c.l.b16 %v1433
      %v1502 = vunpack.c.l.b16 %v1434
      %v1503 = vunpack.c.l.b16 %v1435
      %v1504 = vunpack.c.l.b16 %v1436
      %v1505 = vunpack.c.l.b16 %v1437
      %v1506 = vunpack.c.l.b16 %v1438
      %v1507 = vunpack.c.l.b16 %v1439
      %v1508 = vunpack.c.l.b16 %v1440
      %v1509 = vunpack.c.l.b16 %v1441
      %v1510 = vunpack.c.l.b16 %v1442
      %v1511 = vunpack.c.l.b16 %v1443
      %v1512 = vunpack.c.l.b16 %v1444
      %v1513 = vunpack.c.l.b16 %v1445
      %v1514 = vunpack.c.l.b16 %v1446
      %v1515 = vunpack.c.l.b16 %v1447
      %v1516 = vunpack.c.l.b16 %v1448
      %v1517 = vunpack.c.l.b16 %v1449
      %v1518 = vunpack.c.l.b16 %v1450
      %v1519 = vunpack.c.l.b16 %v1451
      %v1520 = vunpack.c.l.b16 %v1452
      %v1521 = vunpack.c.l.b16 %v1453
      %v1522 = vunpack.c.l.b16 %v1454
      %v1523 = vunpack.c.l.b16 %v1455
      %v1524 = vpack.c.b16 %v1493, %v1492
      %v1525 = vpack.c.b16 %v1495, %v1494
      %v1526 = vpack.c.b16 %v1497, %v1496
      %v1527 = vpack.c.b16 %v1499, %v1498
      %v1528 = vpack.c.b16 %v1501, %v1500
      %v1529 = vpack.c.b16 %v1503, %v1502
      %v1530 = vpack.c.b16 %v1505, %v1504
      %v1531 = vpack.c.b16 %v1507, %v1506
      %v1532 = vpack.c.b16 %v1509, %v1508
      %v1533 = vpack.c.b16 %v1511, %v1510
      %v1534 = vpack.c.b16 %v1513, %v1512
      %v1535 = vpack.c.b16 %v1515, %v1514
      %v1536 = vpack.c.b16 %v1517, %v1516
      %v1537 = vpack.c.b16 %v1519, %v1518
      %v1538 = vpack.c.b16 %v1521, %v1520
      %v1539 = vpack.c.b16 %v1523, %v1522
      %1556 = vmatpush.bf16.msra.mxu0 %v1531
      %1557 = vmatpush.bf16.msra.mxu0 %v1530
      %1558 = vmatpush.bf16.msra.mxu0 %v1529
      %1559 = vmatpush.bf16.msra.mxu0 %v1528
      %1560 = vmatpush.bf16.msra.mxu0 %v1527
      %1561 = vmatpush.bf16.msra.mxu0 %v1526
      %1562 = vmatpush.bf16.msra.mxu0 %v1525
      %1563 = vmatpush.bf16.msra.mxu0 %v1524
      %1564 = vmatmul.bf16.gmra.mxu0 %v1422
      %v1565 = vpop.f32.mrf.mxu0
      %v1566 = vadd.f32 %v1458, %v1565
      %v1567 = vpop.f32.mrf.mxu0
      %1568 = vdwg.mxu0
      %1569 = vmatpush.bf16.msra.mxu0 %v1539
      %1570 = vmatpush.bf16.msra.mxu0 %v1538
      %1571 = vmatpush.bf16.msra.mxu0 %v1537
      %1572 = vmatpush.bf16.msra.mxu0 %v1536
      %1573 = vmatpush.bf16.msra.mxu0 %v1535
      %1574 = vmatpush.bf16.msra.mxu0 %v1534
      %1575 = vmatpush.bf16.msra.mxu0 %v1533
      %1576 = vmatpush.bf16.msra.mxu0 %v1532
      %1577 = vmatmul.bf16.gmra.mxu0 %v1423
      %v1578 = vpop.f32.mrf.mxu0
      %v1579 = vadd.f32 %v1566, %v1578
      %v1580 = vpop.f32.mrf.mxu0
      %1581 = vdwg.mxu0
      %1582 = vst [vmem:[#allocation12] sm:$0xff] %v1579
    $region49: #{tpu_custom_call.1} parent=1 // pred_fallthru
      _
    // Predicated region
    $region50: #{tpu_custom_call.1} parent=1 // pred_check
      _
    $region51: #{tpu_custom_call.1} parent=1 // pred_check_branch
      %1584 = sbr.rel (0) target = $region53
    $region52: #{tpu_custom_call.1} parent=1 // pred_region
      %1586 = vsyncadd [#allocation6], 0
      %s1588 = sshll.u32 [#allocation12], 4
      %s1589 = int_to_ptr.vmem [resolvable:$true] %s1588
      %s1590 = sshll.u32 %s6, 4
      %s1591 = int_to_ptr.hbm [resolvable:$true] %s1590
      %1593 = dma.vmem_to_hbm [thread:$0]  %s1589, 128, %s1591, [#allocation6]
    $region53: #{tpu_custom_call.1} parent=1 // pred_fallthru
      _
    // Predicated region
    $region54: #{tpu_custom_call.1} parent=1 // pred_check
      _
    $region55: #{tpu_custom_call.1} parent=1 // pred_check_branch
      %1595 = sbr.rel (0) target = $region57
    $region56: #{tpu_custom_call.1} parent=1 // pred_region
      %1597 = dma.done [#allocation6], 128
    $region57: #{tpu_custom_call.1} parent=1 // pred_fallthru
      _
    %1598 = vsyncpa [#allocation5], 1
    %1599 = vsyncpa [#allocation8], 1
    %1600 = vsyncpa [#allocation11], 1
    %1601 = vsyncpa [#allocation6], 1

</llo_original>
